<compile_context>
chip_gen: v7x
topology: tpu7x:2x2x1
jax: 0.10.0
libtpu: 0.0.40
codegen_flags: <defaults>
</compile_context>

<pallas_src>
import functools

import jax
import jax.numpy as jnp
from jax.experimental import pallas as pl
from jax.experimental.pallas import tpu as pltpu


_M_TILE = 256            # target row tile for [M, H] activations
_I_TILE = 2048           # max FFN-intermediate tile (reduction axis)


def _round_up(x, m):
    return (x + m - 1) // m * m


@functools.lru_cache(maxsize=None)
def _vmem_limit_bytes():
    """~75% of physical VMEM (96 MiB on v5e/v6e, 48 MiB on v7x)."""
    try:
        cap = int(pltpu.get_tpu_info().vmem_capacity_bytes)
    except Exception:
        cap = 64 * 1024 * 1024
    return min((cap * 3) // 4, 100 * 1024 * 1024)


def _compiler_params(semantics):
    return pltpu.CompilerParams(
        dimension_semantics=tuple(semantics),
        vmem_limit_bytes=_vmem_limit_bytes())


def _row_tile(m):
    """Largest multiple-of-8 row tile <= _M_TILE that divides m (m % 8 == 0)."""
    t = max(min(_M_TILE, m) // 8 * 8, 8)
    while m % t:
        t -= 8
    return t


def _inter_tile(i_dim):
    """FFN intermediate tile: multiple of 128 dividing I, capped at _I_TILE."""
    if i_dim <= _I_TILE:
        return i_dim
    t = _I_TILE
    while t >= 128:
        if i_dim % t == 0:
            return t
        t -= 128
    return i_dim


def _heads_per_group(n_heads, d_head):
    """Heads per attention group so the group width is 128-lane aligned."""
    for hg in range(1, n_heads + 1):
        if n_heads % hg == 0 and (hg * d_head) % 128 == 0:
            return hg
    return n_heads          # single group; group width == hidden (full dim)


def _group_qkv(wq, wk, wv, bq, bk, bv, n_heads, heads_per_group):
    """Rearrange Q/K/V weights into the lane-aligned grouped layout
    wqkv_g: [G, H, 3*gw]  (gw = heads_per_group * d_head, columns = [Q|K|V])
    bqkv_g: [G, 1, 3*gw]
    The same transform applies when loading a real BERT checkpoint."""
    H = wq.shape[0]
    d_head = H // n_heads
    G = n_heads // heads_per_group
    gw = heads_per_group * d_head

    def wsplit(w):                               # [H, H] -> [G, H, gw]
        return w.reshape(H, G, gw).transpose(1, 0, 2)

    def bsplit(b):                               # [H]    -> [G, 1, gw]
        return b.reshape(G, 1, gw)

    wg = jnp.concatenate([wsplit(wq), wsplit(wk), wsplit(wv)], axis=-1)
    bg = jnp.concatenate([bsplit(bq), bsplit(bk), bsplit(bv)], axis=-1)
    return wg, bg


# ----------------------------- Pallas kernels ------------------------------

def _layernorm_kernel(x_ref, g_ref, b_ref, o_ref, *, eps):
    x = x_ref[...].astype(jnp.float32)
    mu = jnp.mean(x, axis=-1, keepdims=True)
    var = jnp.mean((x - mu) * (x - mu), axis=-1, keepdims=True)
    o_ref[...] = ((x - mu) * jax.lax.rsqrt(var + eps) * g_ref[...]
                  + b_ref[...]).astype(o_ref.dtype)


def _qkv_attention_kernel(x_ref, w_ref, b_ref, bias_ref, o_ref, *,
                          scale, heads_per_group, d_head):
    """Fused QKV projection + softmax attention for one (batch, head-group)."""
    gw = heads_per_group * d_head
    x = x_ref[...]                                        # [S, H] bf16
    # QKV projection for this head group; cast straight to bf16 (review #1).
    qkv = (jnp.dot(x, w_ref[0], preferred_element_type=jnp.float32)
           + b_ref[0]).astype(jnp.bfloat16)               # [S, 3*gw]
    bias = bias_ref[0]                                    # [1, S] additive mask
    for h in range(heads_per_group):
        lo = h * d_head
        q = qkv[:, lo:lo + d_head]
        k = qkv[:, gw + lo:gw + lo + d_head]
        v = qkv[:, 2 * gw + lo:2 * gw + lo + d_head]
        # q @ k^T without an explicit transpose (contract on d_head).
        s = jax.lax.dot_general(q, k, (((1,), (1,)), ((), ())),
                                preferred_element_type=jnp.float32)
        s = s * scale + bias
        s = s - jnp.max(s, axis=-1, keepdims=True)
        p = jnp.exp(s)
        p = p * pl.reciprocal(jnp.sum(p, axis=-1, keepdims=True), approx=True)
        # Stream each head's context straight into the output block (review #2).
        o_ref[:, lo:lo + d_head] = jnp.dot(
            p.astype(jnp.bfloat16), v,
            preferred_element_type=jnp.float32).astype(o_ref.dtype)


def _linear_res_ln_kernel(x_ref, w_ref, b_ref, res_ref, g_ref, be_ref, o_ref,
                          *, eps):
    """LayerNorm(x @ w + b + residual)  (attention-output projection)."""
    y = jnp.dot(x_ref[...], w_ref[...], preferred_element_type=jnp.float32)
    y = y + b_ref[...] + res_ref[...].astype(jnp.float32)
    mu = jnp.mean(y, axis=-1, keepdims=True)
    var = jnp.mean((y - mu) * (y - mu), axis=-1, keepdims=True)
    o_ref[...] = ((y - mu) * jax.lax.rsqrt(var + eps) * g_ref[...]
                  + be_ref[...]).astype(o_ref.dtype)


def _ffn_res_ln_kernel(x_ref, wi_ref, bi_ref, wf_ref, bf_ref, g_ref, be_ref,
                       *rest, eps, with_seq_head):
    """LayerNorm(x + W_f @ gelu(W_i @ x)) with the intermediate dimension tiled
    over grid axis 1 (reduction) and an f32 VMEM accumulator. Optionally fuses
    the sequence-labeling head sigmoid(LN_out @ w_seq + b_seq)."""
    if with_seq_head:
        sw_ref, sb_ref, o_ref, os_ref, acc_ref = rest
    else:
        o_ref, acc_ref = rest

    k = pl.program_id(1)

    @pl.when(k == 0)
    def _():
        acc_ref[...] = jnp.zeros_like(acc_ref)

    x = x_ref[...]                                         # [tm, H] bf16
    h = jnp.dot(x, wi_ref[...], preferred_element_type=jnp.float32) + bi_ref[...]
    # TODO(synk): HF BERT uses exact (erf) GELU; tanh approximation (bf16) here.
    h = jax.nn.gelu(h.astype(jnp.bfloat16), approximate=True)
    acc_ref[...] += jnp.dot(h, wf_ref[...], preferred_element_type=jnp.float32)

    @pl.when(k == pl.num_programs(1) - 1)
    def _():
        y = acc_ref[...] + bf_ref[...] + x.astype(jnp.float32)
        mu = jnp.mean(y, axis=-1, keepdims=True)
        var = jnp.mean((y - mu) * (y - mu), axis=-1, keepdims=True)
        yn = (y - mu) * jax.lax.rsqrt(var + eps) * g_ref[...] + be_ref[...]
        o_ref[...] = yn.astype(o_ref.dtype)
        if with_seq_head:
            z = jnp.sum(yn * sw_ref[...], axis=-1, keepdims=True) + sb_ref[...]
            os_ref[...] = jax.nn.sigmoid(z).astype(os_ref.dtype)


def _pooler_cls_kernel(x_ref, pw_ref, pb_ref, cw_ref, cb_ref, o_ref):
    """sigmoid(Linear(tanh(Linear(cls))))  -- fused pooler + classifier head."""
    x = x_ref[...]                                               # bf16 [B, H]
    pooled = jnp.tanh(jnp.dot(x, pw_ref[...],
                              preferred_element_type=jnp.float32) + pb_ref[...])
    logits = jnp.dot(pooled.astype(jnp.bfloat16), cw_ref[...],
                     preferred_element_type=jnp.float32) + cb_ref[...]
    o_ref[...] = jax.nn.sigmoid(logits).astype(o_ref.dtype)


# ----------------------------- Pallas wrappers ------------------------------

def pallas_layernorm(x, gamma, beta, eps=1e-12):
    M, H = x.shape
    tm = _row_tile(M)
    return pl.pallas_call(
        functools.partial(_layernorm_kernel, eps=eps),
        out_shape=jax.ShapeDtypeStruct((M, H), jnp.bfloat16),
        grid=(M // tm,),
        in_specs=[
            pl.BlockSpec((tm, H), lambda i: (i, 0)),
            pl.BlockSpec((1, H), lambda i: (0, 0)),
            pl.BlockSpec((1, H), lambda i: (0, 0)),
        ],
        out_specs=pl.BlockSpec((tm, H), lambda i: (i, 0)),
        compiler_params=_compiler_params(("parallel",)),
    )(x, gamma.reshape(1, H), beta.reshape(1, H))


def pallas_qkv_attention(x, wqkv_g, bqkv_g, mask_bias, *, n_heads, scale,
                         batch, seq):
    """x: [M, H] (M = batch*seq). Fused QKV projection + attention.
    Grid = (batch, head_groups) -> both 'parallel' (2 TensorCores on v7x)."""
    M, H = x.shape
    assert M == batch * seq
    G, _, w3 = wqkv_g.shape
    gw = w3 // 3
    hg = n_heads // G
    d_head = H // n_heads
    kernel = functools.partial(_qkv_attention_kernel, scale=scale,
                               heads_per_group=hg, d_head=d_head)
    return pl.pallas_call(
        kernel,
        out_shape=jax.ShapeDtypeStruct((M, H), jnp.bfloat16),
        grid=(batch, G),
        in_specs=[
            pl.BlockSpec((seq, H), lambda b, g: (b, 0)),       # resident over g
            pl.BlockSpec((1, H, 3 * gw), lambda b, g: (g, 0, 0)),
            pl.BlockSpec((1, 1, 3 * gw), lambda b, g: (g, 0, 0)),
            pl.BlockSpec((1, 1, seq), lambda b, g: (b, 0, 0)),
        ],
        out_specs=pl.BlockSpec((seq, gw), lambda b, g: (b, g)),
        compiler_params=_compiler_params(("parallel", "parallel")),
    )(x, wqkv_g, bqkv_g, mask_bias)


def pallas_linear_res_ln(x, w, b, res, gamma, beta, eps=1e-12):
    M, K = x.shape
    N = w.shape[1]
    tm = _row_tile(M)
    return pl.pallas_call(
        functools.partial(_linear_res_ln_kernel, eps=eps),
        out_shape=jax.ShapeDtypeStruct((M, N), jnp.bfloat16),
        grid=(M // tm,),
        in_specs=[
            pl.BlockSpec((tm, K), lambda i: (i, 0)),
            pl.BlockSpec((K, N), lambda i: (0, 0)),     # weight resident
            pl.BlockSpec((1, N), lambda i: (0, 0)),
            pl.BlockSpec((tm, N), lambda i: (i, 0)),
            pl.BlockSpec((1, N), lambda i: (0, 0)),
            pl.BlockSpec((1, N), lambda i: (0, 0)),
        ],
        out_specs=pl.BlockSpec((tm, N), lambda i: (i, 0)),
        compiler_params=_compiler_params(("parallel",)),
    )(x, w, b.reshape(1, N), res, gamma.reshape(1, N), beta.reshape(1, N))


def pallas_ffn_res_ln(x, wi, bi, wf, bf, gamma, beta,
                      seq_w=None, seq_b=None, eps=1e-12):
    """Fused FFN + residual + LayerNorm, intermediate axis tiled (reduction).
    When seq_w/seq_b given, also emits sigmoid(LN_out @ seq_w + seq_b)."""
    M, H = x.shape
    I = wi.shape[1]
    tm = _row_tile(M)
    tI = _inter_tile(I)
    with_seq = seq_w is not None

    in_specs = [
        pl.BlockSpec((tm, H), lambda i, k: (i, 0)),     # x resident across k
        pl.BlockSpec((H, tI), lambda i, k: (0, k)),
        pl.BlockSpec((1, tI), lambda i, k: (0, k)),
        pl.BlockSpec((tI, H), lambda i, k: (k, 0)),
        pl.BlockSpec((1, H), lambda i, k: (0, 0)),
        pl.BlockSpec((1, H), lambda i, k: (0, 0)),
        pl.BlockSpec((1, H), lambda i, k: (0, 0)),
    ]
    args = [x, wi, bi.reshape(1, I), wf, bf.reshape(1, H),
            gamma.reshape(1, H), beta.reshape(1, H)]
    if with_seq:
        in_specs += [pl.BlockSpec((1, H), lambda i, k: (0, 0)),
                     pl.BlockSpec((1, 1), lambda i, k: (0, 0))]
        args += [seq_w.reshape(1, H), seq_b.reshape(1, 1)]
        out_shape = (jax.ShapeDtypeStruct((M, H), jnp.bfloat16),
                     jax.ShapeDtypeStruct((M, 1), jnp.float32))
        out_specs = (pl.BlockSpec((tm, H), lambda i, k: (i, 0)),
                     pl.BlockSpec((tm, 1), lambda i, k: (i, 0)))
    else:
        out_shape = jax.ShapeDtypeStruct((M, H), jnp.bfloat16)
        out_specs = pl.BlockSpec((tm, H), lambda i, k: (i, 0))

    return pl.pallas_call(
        functools.partial(_ffn_res_ln_kernel, eps=eps, with_seq_head=with_seq),
        out_shape=out_shape,
        grid=(M // tm, I // tI),
        in_specs=in_specs,
        out_specs=out_specs,
        scratch_shapes=[pltpu.VMEM((tm, H), jnp.float32)],
        compiler_params=_compiler_params(("parallel", "arbitrary")),
    )(*args)


def pallas_pooler_cls(cls_x, pw, pb, cw, cb):
    B, H = cls_x.shape
    NC = cw.shape[1]
    return pl.pallas_call(
        _pooler_cls_kernel,
        out_shape=jax.ShapeDtypeStruct((B, NC), jnp.float32),
        grid=(1,),
        in_specs=[
            pl.BlockSpec((B, H), lambda i: (0, 0)),
            pl.BlockSpec((H, H), lambda i: (0, 0)),
            pl.BlockSpec((1, H), lambda i: (0, 0)),
            pl.BlockSpec((H, NC), lambda i: (0, 0)),
            pl.BlockSpec((1, NC), lambda i: (0, 0)),
        ],
        out_specs=pl.BlockSpec((B, NC), lambda i: (0, 0)),
        compiler_params=_compiler_params(("parallel",)),
    )(cls_x, pw, pb.reshape(1, H), cw, cb.reshape(1, NC))


# ----------------------------- Model (glue + kernels) -----------------------

def init_params(key, *, vocab, max_pos, hidden, n_heads, n_layers,
                intermediate, num_classes):
    # TODO(synk): pretrained 'bert-base-uncased' weights not loadable in-script;
    # random init with the same structure is used.
    scale = 0.02
    d_head = hidden // n_heads
    hg = _heads_per_group(n_heads, d_head)

    def nrm(k, shape, dtype=jnp.bfloat16):
        return (scale * jax.random.normal(k, shape, jnp.float32)).astype(dtype)

    keys = iter(jax.random.split(key, 6 + 6 * n_layers))
    p = {
        "word_emb": nrm(next(keys), (vocab, hidden), jnp.float32),
        "pos_emb": nrm(next(keys), (max_pos, hidden), jnp.float32),
        "tok_emb": nrm(next(keys), (2, hidden), jnp.float32),
        "emb_ln_g": jnp.ones((hidden,), jnp.float32),
        "emb_ln_b": jnp.zeros((hidden,), jnp.float32),
        "pooler_w": nrm(next(keys), (hidden, hidden)),
        "pooler_b": jnp.zeros((hidden,), jnp.float32),
        "cls_w": nrm(next(keys), (hidden, num_classes)),
        "cls_b": jnp.zeros((num_classes,), jnp.float32),
        "seq_w": nrm(next(keys), (1, hidden), jnp.float32),
        "seq_b": jnp.zeros((1,), jnp.float32),
        "layers": [],
    }
    for _ in range(n_layers):
        wq = nrm(next(keys), (hidden, hidden))
        wk = nrm(next(keys), (hidden, hidden))
        wv = nrm(next(keys), (hidden, hidden))
        zb = jnp.zeros((hidden,), jnp.float32)
        wqkv_g, bqkv_g = _group_qkv(wq, wk, wv, zb, zb, zb, n_heads, hg)
        lp = {
            "wqkv_g": wqkv_g,                     # [G, H, 3*gw] lane-aligned
            "bqkv_g": bqkv_g,                     # [G, 1, 3*gw]
            "wo": nrm(next(keys), (hidden, hidden)),
            "bo": jnp.zeros((hidden,), jnp.float32),
            "ln1_g": jnp.ones((hidden,), jnp.float32),
            "ln1_b": jnp.zeros((hidden,), jnp.float32),
            "wi": nrm(next(keys), (hidden, intermediate)),
            "bi": jnp.zeros((intermediate,), jnp.float32),
            "wf": nrm(next(keys), (intermediate, hidden)),
            "bf": jnp.zeros((hidden,), jnp.float32),
            "ln2_g": jnp.ones((hidden,), jnp.float32),
            "ln2_b": jnp.zeros((hidden,), jnp.float32),
        }
        p["layers"].append(lp)
    return p


def flat_bert_multitask_forward(params, input_ids, att_mask, *, n_heads):
    B, S = input_ids.shape
    H = params["word_emb"].shape[1]
    d_head = H // n_heads
    scale = 1.0 / (d_head ** 0.5)

    # Pad the sequence ONCE to a multiple of 8 (sublane); padded key positions
    # are masked out, padded rows are dropped at the end (review #9).
    S_pad = _round_up(S, 8)
    M = B * S_pad

    # --- embeddings (gather is glue; LayerNorm is a kernel) ---
    # TODO(synk): only token-type-0 embedding is added (token_type_ids == 0).
    emb = (params["word_emb"][input_ids]
           + params["pos_emb"][:S][None, :, :]
           + params["tok_emb"][0][None, None, :])                 # [B,S,H] f32
    if S_pad != S:
        emb = jnp.pad(emb, ((0, 0), (0, S_pad - S), (0, 0)))
        att_mask = jnp.pad(att_mask, ((0, 0), (0, S_pad - S)))
    h = pallas_layernorm(emb.reshape(M, H),
                         params["emb_ln_g"], params["emb_ln_b"])   # bf16 [M,H]

    # additive attention-mask bias, [B, 1, S_pad]
    mask_bias = ((1.0 - att_mask.astype(jnp.float32)) * (-1e9)).reshape(B, 1, S_pad)

    n_layers = len(params["layers"])
    seq_prob = None
    for li, lp in enumerate(params["layers"]):
        x = h                                                      # [M, H]
        # fused QKV projection + multi-head attention (no [M,3H] HBM tensor)
        ctx = pallas_qkv_attention(x, lp["wqkv_g"], lp["bqkv_g"], mask_bias,
                                   n_heads=n_heads, scale=scale,
                                   batch=B, seq=S_pad)             # [M, H]
        # attn-out projection + residual + LayerNorm fused
        h1 = pallas_linear_res_ln(ctx, lp["wo"], lp["bo"], x,
                                  lp["ln1_g"], lp["ln1_b"])
        # fused FFN (+ seq-labeling head on the last layer)
        if li == n_layers - 1:
            h, seq_prob = pallas_ffn_res_ln(h1, lp["wi"], lp["bi"], lp["wf"],
                                            lp["bf"], lp["ln2_g"], lp["ln2_b"],
                                            seq_w=params["seq_w"],
                                            seq_b=params["seq_b"])
        else:
            h = pallas_ffn_res_ln(h1, lp["wi"], lp["bi"], lp["wf"], lp["bf"],
                                  lp["ln2_g"], lp["ln2_b"])

    hidden_states = h.reshape(B, S_pad, H)

    # --- BERT pooler + classification head fused: sigmoid(W_c tanh(W_p cls)) ---
    cls_tokens = hidden_states[:, 0, :]                             # [B, H]
    output = pallas_pooler_cls(cls_tokens, params["pooler_w"],
                               params["pooler_b"], params["cls_w"],
                               params["cls_b"])                     # [B, NC]

    # --- sequence-labeling head (already fused into the last FFN kernel) ---
    out_seqlabeling = seq_prob.reshape(B, S_pad, 1)[:, :S]          # [B, S, 1]
    return output, out_seqlabeling


# ----------------------------- demo -----------------------------------------

if __name__ == "__main__":
    B, S = 2, 8
    HIDDEN, N_HEADS, N_LAYERS, INTERMEDIATE = 32, 2, 2, 64
    VOCAB, MAX_POS, NUM_CLASSES = 100, 64, 3

    key = jax.random.PRNGKey(0)
    k_param, k_ids = jax.random.split(key)

    params = init_params(k_param, vocab=VOCAB, max_pos=MAX_POS, hidden=HIDDEN,
                         n_heads=N_HEADS, n_layers=N_LAYERS,
                         intermediate=INTERMEDIATE, num_classes=NUM_CLASSES)

    input_ids = jax.random.randint(k_ids, (B, S), 0, VOCAB, dtype=jnp.int32)
    # mask out the tail of the second sequence
    att_mask = jnp.stack([jnp.ones((S,), jnp.float32),
                          (jnp.arange(S) < 6).astype(jnp.float32)], axis=0)

    fwd = jax.jit(functools.partial(flat_bert_multitask_forward,
                                    n_heads=N_HEADS))
    output, out_seqlabeling = fwd(params, input_ids, att_mask)
    jax.block_until_ready((output, out_seqlabeling))

    assert output.shape == (B, NUM_CLASSES)
    assert out_seqlabeling.shape == (B, S, 1)
    assert bool(jnp.all(jnp.isfinite(output)))
    assert bool(jnp.all(jnp.isfinite(out_seqlabeling)))
    print("KERNEL_OK")
</pallas_src>

<mosaic_0001>
module attributes {stable_mosaic.version = 11 : i64} {
  func.func @_qkv_attention_kernel(%arg0: i32, %arg1: i32, %arg2: memref<8x32xbf16, #tpu.memory_space<vmem>>, %arg3: memref<1x32x96xbf16, #tpu.memory_space<vmem>>, %arg4: memref<1x1x96xf32, #tpu.memory_space<vmem>>, %arg5: memref<1x1x8xf32, #tpu.memory_space<vmem>>, %arg6: memref<8x32xbf16, #tpu.memory_space<vmem>>) attributes {dimension_semantics = [#tpu.dimension_semantics<parallel>, #tpu.dimension_semantics<parallel>], iteration_bounds = array<i64: 2, 1>, scalar_prefetch = 0 : i64, scratch_operands = 0 : i64, tpu.core_type = #tpu.core_type<tc>, window_params = [{transform_indices = @transform_0, window_bounds = array<i64: 8, 32>}, {transform_indices = @transform_1, window_bounds = array<i64: 1, 32, 96>}, {transform_indices = @transform_2, window_bounds = array<i64: 1, 1, 96>}, {transform_indices = @transform_3, window_bounds = array<i64: 1, 1, 8>}, {transform_indices = @transform_4, window_bounds = array<i64: 8, 32>}]} {
    %c0 = arith.constant 0 : index
    %c0_0 = arith.constant 0 : index
    %0 = vector.load %arg2[%c0, %c0_0] : memref<8x32xbf16, #tpu.memory_space<vmem>>, vector<8x32xbf16>
    %c0_1 = arith.constant 0 : index
    %c0_2 = arith.constant 0 : index
    %c0_3 = arith.constant 0 : index
    %1 = vector.load %arg3[%c0_1, %c0_2, %c0_3] : memref<1x32x96xbf16, #tpu.memory_space<vmem>>, vector<1x32x96xbf16>
    %2 = vector.shape_cast %1 : vector<1x32x96xbf16> to vector<32x96xbf16>
    %cst = arith.constant dense<0.000000e+00> : vector<8x96xf32>
    %3 = tpu.matmul %0, %2, %cst {dimension_numbers = #tpu.dot_dimension_numbers<[1], [0], [0], [1], [0, 0, 1, 1], [], []>} : vector<8x32xbf16>, vector<32x96xbf16>, vector<8x96xf32> -> vector<8x96xf32>
    %c0_4 = arith.constant 0 : index
    %c0_5 = arith.constant 0 : index
    %c0_6 = arith.constant 0 : index
    %4 = vector.load %arg4[%c0_4, %c0_5, %c0_6] : memref<1x1x96xf32, #tpu.memory_space<vmem>>, vector<1x1x96xf32>
    %5 = vector.shape_cast %4 : vector<1x1x96xf32> to vector<1x96xf32>
    %6 = vector.broadcast %5 : vector<1x96xf32> to vector<8x96xf32>
    %7 = arith.addf %3, %6 : vector<8x96xf32>
    %8 = arith.truncf %7 : vector<8x96xf32> to vector<8x96xbf16>
    %c0_7 = arith.constant 0 : index
    %c0_8 = arith.constant 0 : index
    %c0_9 = arith.constant 0 : index
    %9 = vector.load %arg5[%c0_7, %c0_8, %c0_9] : memref<1x1x8xf32, #tpu.memory_space<vmem>>, vector<1x1x8xf32>
    %10 = vector.shape_cast %9 : vector<1x1x8xf32> to vector<1x8xf32>
    %11 = vector.extract_strided_slice %8 {offsets = [0, 0], sizes = [8, 16], strides = [1, 1]} : vector<8x96xbf16> to vector<8x16xbf16>
    %12 = vector.extract_strided_slice %8 {offsets = [0, 32], sizes = [8, 16], strides = [1, 1]} : vector<8x96xbf16> to vector<8x16xbf16>
    %13 = vector.extract_strided_slice %8 {offsets = [0, 64], sizes = [8, 16], strides = [1, 1]} : vector<8x96xbf16> to vector<8x16xbf16>
    %cst_10 = arith.constant dense<0.000000e+00> : vector<8x8xf32>
    %14 = tpu.matmul %11, %12, %cst_10 {dimension_numbers = #tpu.dot_dimension_numbers<[1], [1], [0], [0], [0, 0, 1, 0], [], []>} : vector<8x16xbf16>, vector<8x16xbf16>, vector<8x8xf32> -> vector<8x8xf32>
    %cst_11 = arith.constant 2.500000e-01 : f32
    %15 = vector.broadcast %cst_11 : f32 to vector<8x8xf32>
    %16 = arith.mulf %14, %15 : vector<8x8xf32>
    %17 = vector.broadcast %10 : vector<1x8xf32> to vector<8x8xf32>
    %18 = arith.addf %16, %17 : vector<8x8xf32>
    %cst_12 = arith.constant dense<0xFF800000> : vector<8xf32>
    %19 = vector.multi_reduction <maximumf>, %18, %cst_12 [1] : vector<8x8xf32> to vector<8xf32>
    %20 = vector.shape_cast %19 : vector<8xf32> to vector<8x1xf32>
    %21 = vector.broadcast %20 : vector<8x1xf32> to vector<8x8xf32>
    %22 = arith.subf %18, %21 : vector<8x8xf32>
    %23 = math.exp %22 : vector<8x8xf32>
    %cst_13 = arith.constant dense<0.000000e+00> : vector<8xf32>
    %24 = vector.multi_reduction <add>, %23, %cst_13 [1] : vector<8x8xf32> to vector<8xf32>
    %25 = vector.shape_cast %24 : vector<8xf32> to vector<8x1xf32>
    %26 = tpu.reciprocal %25 {approx = true} : vector<8x1xf32> -> vector<8x1xf32>
    %27 = vector.broadcast %26 : vector<8x1xf32> to vector<8x8xf32>
    %28 = arith.mulf %23, %27 : vector<8x8xf32>
    %29 = arith.truncf %28 : vector<8x8xf32> to vector<8x8xbf16>
    %cst_14 = arith.constant dense<0.000000e+00> : vector<8x16xf32>
    %30 = tpu.matmul %29, %13, %cst_14 {dimension_numbers = #tpu.dot_dimension_numbers<[1], [0], [0], [1], [0, 0, 1, 1], [], []>} : vector<8x8xbf16>, vector<8x16xbf16>, vector<8x16xf32> -> vector<8x16xf32>
    %31 = arith.truncf %30 : vector<8x16xf32> to vector<8x16xbf16>
    %c0_15 = arith.constant 0 : index
    %c0_16 = arith.constant 0 : index
    %32 = vector.load %arg6[%c0_15, %c0_16] : memref<8x32xbf16, #tpu.memory_space<vmem>>, vector<8x16xbf16>
    tpu.vector_store %arg6[%c0_15, %c0_16], %31 {strides = array<i32>} : memref<8x32xbf16, #tpu.memory_space<vmem>>, vector<8x16xbf16>,
    %33 = vector.extract_strided_slice %8 {offsets = [0, 16], sizes = [8, 16], strides = [1, 1]} : vector<8x96xbf16> to vector<8x16xbf16>
    %34 = vector.extract_strided_slice %8 {offsets = [0, 48], sizes = [8, 16], strides = [1, 1]} : vector<8x96xbf16> to vector<8x16xbf16>
    %35 = vector.extract_strided_slice %8 {offsets = [0, 80], sizes = [8, 16], strides = [1, 1]} : vector<8x96xbf16> to vector<8x16xbf16>
    %cst_17 = arith.constant dense<0.000000e+00> : vector<8x8xf32>
    %36 = tpu.matmul %33, %34, %cst_17 {dimension_numbers = #tpu.dot_dimension_numbers<[1], [1], [0], [0], [0, 0, 1, 0], [], []>} : vector<8x16xbf16>, vector<8x16xbf16>, vector<8x8xf32> -> vector<8x8xf32>
    %cst_18 = arith.constant 2.500000e-01 : f32
    %37 = vector.broadcast %cst_18 : f32 to vector<8x8xf32>
    %38 = arith.mulf %36, %37 : vector<8x8xf32>
    %39 = vector.broadcast %10 : vector<1x8xf32> to vector<8x8xf32>
    %40 = arith.addf %38, %39 : vector<8x8xf32>
    %cst_19 = arith.constant dense<0xFF800000> : vector<8xf32>
    %41 = vector.multi_reduction <maximumf>, %40, %cst_19 [1] : vector<8x8xf32> to vector<8xf32>
    %42 = vector.shape_cast %41 : vector<8xf32> to vector<8x1xf32>
    %43 = vector.broadcast %42 : vector<8x1xf32> to vector<8x8xf32>
    %44 = arith.subf %40, %43 : vector<8x8xf32>
    %45 = math.exp %44 : vector<8x8xf32>
    %cst_20 = arith.constant dense<0.000000e+00> : vector<8xf32>
    %46 = vector.multi_reduction <add>, %45, %cst_20 [1] : vector<8x8xf32> to vector<8xf32>
    %47 = vector.shape_cast %46 : vector<8xf32> to vector<8x1xf32>
    %48 = tpu.reciprocal %47 {approx = true} : vector<8x1xf32> -> vector<8x1xf32>
    %49 = vector.broadcast %48 : vector<8x1xf32> to vector<8x8xf32>
    %50 = arith.mulf %45, %49 : vector<8x8xf32>
    %51 = arith.truncf %50 : vector<8x8xf32> to vector<8x8xbf16>
    %cst_21 = arith.constant dense<0.000000e+00> : vector<8x16xf32>
    %52 = tpu.matmul %51, %35, %cst_21 {dimension_numbers = #tpu.dot_dimension_numbers<[1], [0], [0], [1], [0, 0, 1, 1], [], []>} : vector<8x8xbf16>, vector<8x16xbf16>, vector<8x16xf32> -> vector<8x16xf32>
    %53 = arith.truncf %52 : vector<8x16xf32> to vector<8x16xbf16>
    %c0_22 = arith.constant 0 : index
    %c16 = arith.constant 16 : index
    %54 = vector.load %arg6[%c0_22, %c16] : memref<8x32xbf16, #tpu.memory_space<vmem>>, vector<8x16xbf16>
    tpu.vector_store %arg6[%c0_22, %c16], %53 {strides = array<i32>} : memref<8x32xbf16, #tpu.memory_space<vmem>>, vector<8x16xbf16>,
    return
  }
  func.func @transform_0(%arg0: i32, %arg1: i32) -> (i32, i32) {
    %c0_i32 = arith.constant 0 : i32
    %c0_i32_0 = arith.constant 0 : i32
    return %arg0, %c0_i32 : i32, i32
  }
  func.func @transform_1(%arg0: i32, %arg1: i32) -> (i32, i32, i32) {
    %c0_i32 = arith.constant 0 : i32
    %c0_i32_0 = arith.constant 0 : i32
    %c0_i32_1 = arith.constant 0 : i32
    return %arg1, %c0_i32, %c0_i32_0 : i32, i32, i32
  }
  func.func @transform_2(%arg0: i32, %arg1: i32) -> (i32, i32, i32) {
    %c0_i32 = arith.constant 0 : i32
    %c0_i32_0 = arith.constant 0 : i32
    %c0_i32_1 = arith.constant 0 : i32
    return %arg1, %c0_i32, %c0_i32_0 : i32, i32, i32
  }
  func.func @transform_3(%arg0: i32, %arg1: i32) -> (i32, i32, i32) {
    %c0_i32 = arith.constant 0 : i32
    %c0_i32_0 = arith.constant 0 : i32
    %c0_i32_1 = arith.constant 0 : i32
    return %arg0, %c0_i32, %c0_i32_0 : i32, i32, i32
  }
  func.func @transform_4(%arg0: i32, %arg1: i32) -> (i32, i32) {
    %c0_i32 = arith.constant 0 : i32
    return %arg0, %arg1 : i32, i32
  }
}

module attributes {stable_mosaic.version = 11 : i64} {
  func.func @_layernorm_kernel(%arg0: i32, %arg1: memref<16x32xf32, #tpu.memory_space<vmem>>, %arg2: memref<1x32xf32, #tpu.memory_space<vmem>>, %arg3: memref<1x32xf32, #tpu.memory_space<vmem>>, %arg4: memref<16x32xbf16, #tpu.memory_space<vmem>>) attributes {dimension_semantics = [#tpu.dimension_semantics<parallel>], iteration_bounds = array<i64: 1>, scalar_prefetch = 0 : i64, scratch_operands = 0 : i64, tpu.core_type = #tpu.core_type<tc>, window_params = [{transform_indices = @transform_0, window_bounds = array<i64: 16, 32>}, {pipeline_mode = #tpu.pipeline_mode<synchronous>, transform_indices = @transform_1, window_bounds = array<i64: 1, 32>}, {pipeline_mode = #tpu.pipeline_mode<synchronous>, transform_indices = @transform_2, window_bounds = array<i64: 1, 32>}, {transform_indices = @transform_3, window_bounds = array<i64: 16, 32>}]} {
    %c0 = arith.constant 0 : index
    %c0_0 = arith.constant 0 : index
    %0 = vector.load %arg1[%c0, %c0_0] : memref<16x32xf32, #tpu.memory_space<vmem>>, vector<16x32xf32>
    %cst = arith.constant dense<0.000000e+00> : vector<16xf32>
    %1 = vector.multi_reduction <add>, %0, %cst [1] : vector<16x32xf32> to vector<16xf32>
    %2 = vector.shape_cast %1 : vector<16xf32> to vector<16x1xf32>
    %cst_1 = arith.constant 3.200000e+01 : f32
    %3 = vector.broadcast %cst_1 : f32 to vector<16x1xf32>
    %4 = arith.divf %2, %3 : vector<16x1xf32>
    %5 = vector.broadcast %4 : vector<16x1xf32> to vector<16x32xf32>
    %6 = arith.subf %0, %5 : vector<16x32xf32>
    %7 = vector.broadcast %4 : vector<16x1xf32> to vector<16x32xf32>
    %8 = arith.subf %0, %7 : vector<16x32xf32>
    %9 = arith.mulf %6, %8 : vector<16x32xf32>
    %cst_2 = arith.constant dense<0.000000e+00> : vector<16xf32>
    %10 = vector.multi_reduction <add>, %9, %cst_2 [1] : vector<16x32xf32> to vector<16xf32>
    %11 = vector.shape_cast %10 : vector<16xf32> to vector<16x1xf32>
    %cst_3 = arith.constant 3.200000e+01 : f32
    %12 = vector.broadcast %cst_3 : f32 to vector<16x1xf32>
    %13 = arith.divf %11, %12 : vector<16x1xf32>
    %14 = vector.broadcast %4 : vector<16x1xf32> to vector<16x32xf32>
    %15 = arith.subf %0, %14 : vector<16x32xf32>
    %cst_4 = arith.constant 9.99999996E-13 : f32
    %16 = vector.broadcast %cst_4 : f32 to vector<16x1xf32>
    %17 = arith.addf %13, %16 : vector<16x1xf32>
    %18 = math.rsqrt %17 : vector<16x1xf32>
    %19 = vector.broadcast %18 : vector<16x1xf32> to vector<16x32xf32>
    %20 = arith.mulf %15, %19 : vector<16x32xf32>
    %c0_5 = arith.constant 0 : index
    %c0_6 = arith.constant 0 : index
    %21 = vector.load %arg2[%c0_5, %c0_6] : memref<1x32xf32, #tpu.memory_space<vmem>>, vector<1x32xf32>
    %22 = vector.broadcast %21 : vector<1x32xf32> to vector<16x32xf32>
    %23 = arith.mulf %20, %22 : vector<16x32xf32>
    %c0_7 = arith.constant 0 : index
    %c0_8 = arith.constant 0 : index
    %24 = vector.load %arg3[%c0_7, %c0_8] : memref<1x32xf32, #tpu.memory_space<vmem>>, vector<1x32xf32>
    %25 = vector.broadcast %24 : vector<1x32xf32> to vector<16x32xf32>
    %26 = arith.addf %23, %25 : vector<16x32xf32>
    %27 = arith.truncf %26 : vector<16x32xf32> to vector<16x32xbf16>
    %c0_9 = arith.constant 0 : index
    %c0_10 = arith.constant 0 : index
    %28 = vector.load %arg4[%c0_9, %c0_10] : memref<16x32xbf16, #tpu.memory_space<vmem>>, vector<16x32xbf16>
    tpu.vector_store %arg4[%c0_9, %c0_10], %27 {strides = array<i32>} : memref<16x32xbf16, #tpu.memory_space<vmem>>, vector<16x32xbf16>,
    return
  }
  func.func @transform_0(%arg0: i32) -> (i32, i32) {
    %c0_i32 = arith.constant 0 : i32
    %c0_i32_0 = arith.constant 0 : i32
    return %arg0, %c0_i32 : i32, i32
  }
  func.func @transform_1(%arg0: i32) -> (i32, i32) {
    %c0_i32 = arith.constant 0 : i32
    %c0_i32_0 = arith.constant 0 : i32
    %c0_i32_1 = arith.constant 0 : i32
    return %c0_i32, %c0_i32_0 : i32, i32
  }
  func.func @transform_2(%arg0: i32) -> (i32, i32) {
    %c0_i32 = arith.constant 0 : i32
    %c0_i32_0 = arith.constant 0 : i32
    %c0_i32_1 = arith.constant 0 : i32
    return %c0_i32, %c0_i32_0 : i32, i32
  }
  func.func @transform_3(%arg0: i32) -> (i32, i32) {
    %c0_i32 = arith.constant 0 : i32
    %c0_i32_0 = arith.constant 0 : i32
    return %arg0, %c0_i32 : i32, i32
  }
}

module attributes {stable_mosaic.version = 11 : i64} {
  func.func @_linear_res_ln_kernel(%arg0: i32, %arg1: memref<16x32xbf16, #tpu.memory_space<vmem>>, %arg2: memref<32x32xbf16, #tpu.memory_space<vmem>>, %arg3: memref<1x32xf32, #tpu.memory_space<vmem>>, %arg4: memref<16x32xbf16, #tpu.memory_space<vmem>>, %arg5: memref<1x32xf32, #tpu.memory_space<vmem>>, %arg6: memref<1x32xf32, #tpu.memory_space<vmem>>, %arg7: memref<16x32xbf16, #tpu.memory_space<vmem>>) attributes {dimension_semantics = [#tpu.dimension_semantics<parallel>], iteration_bounds = array<i64: 1>, scalar_prefetch = 0 : i64, scratch_operands = 0 : i64, tpu.core_type = #tpu.core_type<tc>, window_params = [{transform_indices = @transform_0, window_bounds = array<i64: 16, 32>}, {pipeline_mode = #tpu.pipeline_mode<synchronous>, transform_indices = @transform_1, window_bounds = array<i64: 32, 32>}, {pipeline_mode = #tpu.pipeline_mode<synchronous>, transform_indices = @transform_2, window_bounds = array<i64: 1, 32>}, {transform_indices = @transform_3, window_bounds = array<i64: 16, 32>}, {pipeline_mode = #tpu.pipeline_mode<synchronous>, transform_indices = @transform_4, window_bounds = array<i64: 1, 32>}, {pipeline_mode = #tpu.pipeline_mode<synchronous>, transform_indices = @transform_5, window_bounds = array<i64: 1, 32>}, {transform_indices = @transform_6, window_bounds = array<i64: 16, 32>}]} {
    %c0 = arith.constant 0 : index
    %c0_0 = arith.constant 0 : index
    %0 = vector.load %arg1[%c0, %c0_0] : memref<16x32xbf16, #tpu.memory_space<vmem>>, vector<16x32xbf16>
    %c0_1 = arith.constant 0 : index
    %c0_2 = arith.constant 0 : index
    %1 = vector.load %arg2[%c0_1, %c0_2] : memref<32x32xbf16, #tpu.memory_space<vmem>>, vector<32x32xbf16>
    %cst = arith.constant dense<0.000000e+00> : vector<16x32xf32>
    %2 = tpu.matmul %0, %1, %cst {dimension_numbers = #tpu.dot_dimension_numbers<[1], [0], [0], [1], [0, 0, 1, 1], [], []>} : vector<16x32xbf16>, vector<32x32xbf16>, vector<16x32xf32> -> vector<16x32xf32>
    %c0_3 = arith.constant 0 : index
    %c0_4 = arith.constant 0 : index
    %3 = vector.load %arg3[%c0_3, %c0_4] : memref<1x32xf32, #tpu.memory_space<vmem>>, vector<1x32xf32>
    %4 = vector.broadcast %3 : vector<1x32xf32> to vector<16x32xf32>
    %5 = arith.addf %2, %4 : vector<16x32xf32>
    %c0_5 = arith.constant 0 : index
    %c0_6 = arith.constant 0 : index
    %6 = vector.load %arg4[%c0_5, %c0_6] : memref<16x32xbf16, #tpu.memory_space<vmem>>, vector<16x32xbf16>
    %7 = arith.extf %6 : vector<16x32xbf16> to vector<16x32xf32>
    %8 = arith.addf %5, %7 : vector<16x32xf32>
    %cst_7 = arith.constant dense<0.000000e+00> : vector<16xf32>
    %9 = vector.multi_reduction <add>, %8, %cst_7 [1] : vector<16x32xf32> to vector<16xf32>
    %10 = vector.shape_cast %9 : vector<16xf32> to vector<16x1xf32>
    %cst_8 = arith.constant 3.200000e+01 : f32
    %11 = vector.broadcast %cst_8 : f32 to vector<16x1xf32>
    %12 = arith.divf %10, %11 : vector<16x1xf32>
    %13 = vector.broadcast %12 : vector<16x1xf32> to vector<16x32xf32>
    %14 = arith.subf %8, %13 : vector<16x32xf32>
    %15 = vector.broadcast %12 : vector<16x1xf32> to vector<16x32xf32>
    %16 = arith.subf %8, %15 : vector<16x32xf32>
    %17 = arith.mulf %14, %16 : vector<16x32xf32>
    %cst_9 = arith.constant dense<0.000000e+00> : vector<16xf32>
    %18 = vector.multi_reduction <add>, %17, %cst_9 [1] : vector<16x32xf32> to vector<16xf32>
    %19 = vector.shape_cast %18 : vector<16xf32> to vector<16x1xf32>
    %cst_10 = arith.constant 3.200000e+01 : f32
    %20 = vector.broadcast %cst_10 : f32 to vector<16x1xf32>
    %21 = arith.divf %19, %20 : vector<16x1xf32>
    %22 = vector.broadcast %12 : vector<16x1xf32> to vector<16x32xf32>
    %23 = arith.subf %8, %22 : vector<16x32xf32>
    %cst_11 = arith.constant 9.99999996E-13 : f32
    %24 = vector.broadcast %cst_11 : f32 to vector<16x1xf32>
    %25 = arith.addf %21, %24 : vector<16x1xf32>
    %26 = math.rsqrt %25 : vector<16x1xf32>
    %27 = vector.broadcast %26 : vector<16x1xf32> to vector<16x32xf32>
    %28 = arith.mulf %23, %27 : vector<16x32xf32>
    %c0_12 = arith.constant 0 : index
    %c0_13 = arith.constant 0 : index
    %29 = vector.load %arg5[%c0_12, %c0_13] : memref<1x32xf32, #tpu.memory_space<vmem>>, vector<1x32xf32>
    %30 = vector.broadcast %29 : vector<1x32xf32> to vector<16x32xf32>
    %31 = arith.mulf %28, %30 : vector<16x32xf32>
    %c0_14 = arith.constant 0 : index
    %c0_15 = arith.constant 0 : index
    %32 = vector.load %arg6[%c0_14, %c0_15] : memref<1x32xf32, #tpu.memory_space<vmem>>, vector<1x32xf32>
    %33 = vector.broadcast %32 : vector<1x32xf32> to vector<16x32xf32>
    %34 = arith.addf %31, %33 : vector<16x32xf32>
    %35 = arith.truncf %34 : vector<16x32xf32> to vector<16x32xbf16>
    %c0_16 = arith.constant 0 : index
    %c0_17 = arith.constant 0 : index
    %36 = vector.load %arg7[%c0_16, %c0_17] : memref<16x32xbf16, #tpu.memory_space<vmem>>, vector<16x32xbf16>
    tpu.vector_store %arg7[%c0_16, %c0_17], %35 {strides = array<i32>} : memref<16x32xbf16, #tpu.memory_space<vmem>>, vector<16x32xbf16>,
    return
  }
  func.func @transform_0(%arg0: i32) -> (i32, i32) {
    %c0_i32 = arith.constant 0 : i32
    %c0_i32_0 = arith.constant 0 : i32
    return %arg0, %c0_i32 : i32, i32
  }
  func.func @transform_1(%arg0: i32) -> (i32, i32) {
    %c0_i32 = arith.constant 0 : i32
    %c0_i32_0 = arith.constant 0 : i32
    %c0_i32_1 = arith.constant 0 : i32
    return %c0_i32, %c0_i32_0 : i32, i32
  }
  func.func @transform_2(%arg0: i32) -> (i32, i32) {
    %c0_i32 = arith.constant 0 : i32
    %c0_i32_0 = arith.constant 0 : i32
    %c0_i32_1 = arith.constant 0 : i32
    return %c0_i32, %c0_i32_0 : i32, i32
  }
  func.func @transform_3(%arg0: i32) -> (i32, i32) {
    %c0_i32 = arith.constant 0 : i32
    %c0_i32_0 = arith.constant 0 : i32
    return %arg0, %c0_i32 : i32, i32
  }
  func.func @transform_4(%arg0: i32) -> (i32, i32) {
    %c0_i32 = arith.constant 0 : i32
    %c0_i32_0 = arith.constant 0 : i32
    %c0_i32_1 = arith.constant 0 : i32
    return %c0_i32, %c0_i32_0 : i32, i32
  }
  func.func @transform_5(%arg0: i32) -> (i32, i32) {
    %c0_i32 = arith.constant 0 : i32
    %c0_i32_0 = arith.constant 0 : i32
    %c0_i32_1 = arith.constant 0 : i32
    return %c0_i32, %c0_i32_0 : i32, i32
  }
  func.func @transform_6(%arg0: i32) -> (i32, i32) {
    %c0_i32 = arith.constant 0 : i32
    %c0_i32_0 = arith.constant 0 : i32
    return %arg0, %c0_i32 : i32, i32
  }
}

module attributes {stable_mosaic.version = 11 : i64} {
  func.func @_ffn_res_ln_kernel(%arg0: i32, %arg1: i32, %arg2: memref<16x32xbf16, #tpu.memory_space<vmem>>, %arg3: memref<32x64xbf16, #tpu.memory_space<vmem>>, %arg4: memref<1x64xf32, #tpu.memory_space<vmem>>, %arg5: memref<64x32xbf16, #tpu.memory_space<vmem>>, %arg6: memref<1x32xf32, #tpu.memory_space<vmem>>, %arg7: memref<1x32xf32, #tpu.memory_space<vmem>>, %arg8: memref<1x32xf32, #tpu.memory_space<vmem>>, %arg9: memref<16x32xbf16, #tpu.memory_space<vmem>>, %arg10: memref<16x32xf32, #tpu.memory_space<vmem>>) attributes {dimension_semantics = [#tpu.dimension_semantics<parallel>, #tpu.dimension_semantics<arbitrary>], iteration_bounds = array<i64: 1, 1>, scalar_prefetch = 0 : i64, scratch_operands = 1 : i64, tpu.core_type = #tpu.core_type<tc>, window_params = [{transform_indices = @transform_0, window_bounds = array<i64: 16, 32>}, {transform_indices = @transform_1, window_bounds = array<i64: 32, 64>}, {transform_indices = @transform_2, window_bounds = array<i64: 1, 64>}, {transform_indices = @transform_3, window_bounds = array<i64: 64, 32>}, {pipeline_mode = #tpu.pipeline_mode<synchronous>, transform_indices = @transform_4, window_bounds = array<i64: 1, 32>}, {pipeline_mode = #tpu.pipeline_mode<synchronous>, transform_indices = @transform_5, window_bounds = array<i64: 1, 32>}, {pipeline_mode = #tpu.pipeline_mode<synchronous>, transform_indices = @transform_6, window_bounds = array<i64: 1, 32>}, {transform_indices = @transform_7, window_bounds = array<i64: 16, 32>}]} {
    %c0_i32 = arith.constant 0 : i32
    %0 = arith.cmpi eq, %arg1, %c0_i32 : i32
    %1 = arith.extui %0 : i1 to i32
    %c0_i32_0 = arith.constant 0 : i32
    %2 = arith.cmpi ne, %1, %c0_i32_0 : i32
    scf.if %2 {
      %cst_19 = arith.constant 0.000000e+00 : f32
      %31 = vector.broadcast %cst_19 : f32 to vector<16x32xf32>
      %c0_20 = arith.constant 0 : index
      %c0_21 = arith.constant 0 : index
      %32 = vector.load %arg10[%c0_20, %c0_21] : memref<16x32xf32, #tpu.memory_space<vmem>>, vector<16x32xf32>
      tpu.vector_store %arg10[%c0_20, %c0_21], %31 {strides = array<i32>} : memref<16x32xf32, #tpu.memory_space<vmem>>, vector<16x32xf32>,
    } else {
    }
    %c0 = arith.constant 0 : index
    %c0_1 = arith.constant 0 : index
    %3 = vector.load %arg2[%c0, %c0_1] : memref<16x32xbf16, #tpu.memory_space<vmem>>, vector<16x32xbf16>
    %c0_2 = arith.constant 0 : index
    %c0_3 = arith.constant 0 : index
    %4 = vector.load %arg3[%c0_2, %c0_3] : memref<32x64xbf16, #tpu.memory_space<vmem>>, vector<32x64xbf16>
    %cst = arith.constant dense<0.000000e+00> : vector<16x64xf32>
    %5 = tpu.matmul %3, %4, %cst {dimension_numbers = #tpu.dot_dimension_numbers<[1], [0], [0], [1], [0, 0, 1, 1], [], []>} : vector<16x32xbf16>, vector<32x64xbf16>, vector<16x64xf32> -> vector<16x64xf32>
    %c0_4 = arith.constant 0 : index
    %c0_5 = arith.constant 0 : index
    %6 = vector.load %arg4[%c0_4, %c0_5] : memref<1x64xf32, #tpu.memory_space<vmem>>, vector<1x64xf32>
    %7 = vector.broadcast %6 : vector<1x64xf32> to vector<16x64xf32>
    %8 = arith.addf %5, %7 : vector<16x64xf32>
    %9 = arith.truncf %8 : vector<16x64xf32> to vector<16x64xbf16>
    %10 = arith.mulf %9, %9 : vector<16x64xbf16>
    %11 = arith.mulf %9, %10 : vector<16x64xbf16>
    %cst_6 = arith.constant 4.467770e-02 : bf16
    %12 = vector.broadcast %cst_6 : bf16 to vector<16x64xbf16>
    %13 = arith.mulf %12, %11 : vector<16x64xbf16>
    %14 = arith.addf %9, %13 : vector<16x64xbf16>
    %cst_7 = arith.constant 7.968750e-01 : bf16
    %15 = vector.broadcast %cst_7 : bf16 to vector<16x64xbf16>
    %16 = arith.mulf %15, %14 : vector<16x64xbf16>
    %17 = math.tanh %16 : vector<16x64xbf16>
    %cst_8 = arith.constant 1.000000e+00 : bf16
    %18 = vector.broadcast %cst_8 : bf16 to vector<16x64xbf16>
    %19 = arith.addf %18, %17 : vector<16x64xbf16>
    %cst_9 = arith.constant 5.000000e-01 : bf16
    %20 = vector.broadcast %cst_9 : bf16 to vector<16x64xbf16>
    %21 = arith.mulf %20, %19 : vector<16x64xbf16>
    %22 = arith.mulf %9, %21 : vector<16x64xbf16>
    %c0_10 = arith.constant 0 : index
    %c0_11 = arith.constant 0 : index
    %23 = vector.load %arg10[%c0_10, %c0_11] : memref<16x32xf32, #tpu.memory_space<vmem>>, vector<16x32xf32>
    %c0_12 = arith.constant 0 : index
    %c0_13 = arith.constant 0 : index
    %24 = vector.load %arg5[%c0_12, %c0_13] : memref<64x32xbf16, #tpu.memory_space<vmem>>, vector<64x32xbf16>
    %cst_14 = arith.constant dense<0.000000e+00> : vector<16x32xf32>
    %25 = tpu.matmul %22, %24, %cst_14 {dimension_numbers = #tpu.dot_dimension_numbers<[1], [0], [0], [1], [0, 0, 1, 1], [], []>} : vector<16x64xbf16>, vector<64x32xbf16>, vector<16x32xf32> -> vector<16x32xf32>
    %26 = arith.addf %23, %25 : vector<16x32xf32>
    %c0_15 = arith.constant 0 : index
    %c0_16 = arith.constant 0 : index
    %27 = vector.load %arg10[%c0_15, %c0_16] : memref<16x32xf32, #tpu.memory_space<vmem>>, vector<16x32xf32>
    tpu.vector_store %arg10[%c0_15, %c0_16], %26 {strides = array<i32>} : memref<16x32xf32, #tpu.memory_space<vmem>>, vector<16x32xf32>,
    %c0_i32_17 = arith.constant 0 : i32
    %28 = arith.cmpi eq, %arg1, %c0_i32_17 : i32
    %29 = arith.extui %28 : i1 to i32
    %c0_i32_18 = arith.constant 0 : i32
    %30 = arith.cmpi ne, %29, %c0_i32_18 : i32
    scf.if %30 {
      %c0_19 = arith.constant 0 : index
      %c0_20 = arith.constant 0 : index
      %31 = vector.load %arg10[%c0_19, %c0_20] : memref<16x32xf32, #tpu.memory_space<vmem>>, vector<16x32xf32>
      %c0_21 = arith.constant 0 : index
      %c0_22 = arith.constant 0 : index
      %32 = vector.load %arg6[%c0_21, %c0_22] : memref<1x32xf32, #tpu.memory_space<vmem>>, vector<1x32xf32>
      %33 = vector.broadcast %32 : vector<1x32xf32> to vector<16x32xf32>
      %34 = arith.addf %31, %33 : vector<16x32xf32>
      %35 = arith.extf %3 : vector<16x32xbf16> to vector<16x32xf32>
      %36 = arith.addf %34, %35 : vector<16x32xf32>
      %cst_23 = arith.constant dense<0.000000e+00> : vector<16xf32>
      %37 = vector.multi_reduction <add>, %36, %cst_23 [1] : vector<16x32xf32> to vector<16xf32>
      %38 = vector.shape_cast %37 : vector<16xf32> to vector<16x1xf32>
      %cst_24 = arith.constant 3.200000e+01 : f32
      %39 = vector.broadcast %cst_24 : f32 to vector<16x1xf32>
      %40 = arith.divf %38, %39 : vector<16x1xf32>
      %41 = vector.broadcast %40 : vector<16x1xf32> to vector<16x32xf32>
      %42 = arith.subf %36, %41 : vector<16x32xf32>
      %43 = vector.broadcast %40 : vector<16x1xf32> to vector<16x32xf32>
      %44 = arith.subf %36, %43 : vector<16x32xf32>
      %45 = arith.mulf %42, %44 : vector<16x32xf32>
      %cst_25 = arith.constant dense<0.000000e+00> : vector<16xf32>
      %46 = vector.multi_reduction <add>, %45, %cst_25 [1] : vector<16x32xf32> to vector<16xf32>
      %47 = vector.shape_cast %46 : vector<16xf32> to vector<16x1xf32>
      %cst_26 = arith.constant 3.200000e+01 : f32
      %48 = vector.broadcast %cst_26 : f32 to vector<16x1xf32>
      %49 = arith.divf %47, %48 : vector<16x1xf32>
      %50 = vector.broadcast %40 : vector<16x1xf32> to vector<16x32xf32>
      %51 = arith.subf %36, %50 : vector<16x32xf32>
      %cst_27 = arith.constant 9.99999996E-13 : f32
      %52 = vector.broadcast %cst_27 : f32 to vector<16x1xf32>
      %53 = arith.addf %49, %52 : vector<16x1xf32>
      %54 = math.rsqrt %53 : vector<16x1xf32>
      %55 = vector.broadcast %54 : vector<16x1xf32> to vector<16x32xf32>
      %56 = arith.mulf %51, %55 : vector<16x32xf32>
      %c0_28 = arith.constant 0 : index
      %c0_29 = arith.constant 0 : index
      %57 = vector.load %arg7[%c0_28, %c0_29] : memref<1x32xf32, #tpu.memory_space<vmem>>, vector<1x32xf32>
      %58 = vector.broadcast %57 : vector<1x32xf32> to vector<16x32xf32>
      %59 = arith.mulf %56, %58 : vector<16x32xf32>
      %c0_30 = arith.constant 0 : index
      %c0_31 = arith.constant 0 : index
      %60 = vector.load %arg8[%c0_30, %c0_31] : memref<1x32xf32, #tpu.memory_space<vmem>>, vector<1x32xf32>
      %61 = vector.broadcast %60 : vector<1x32xf32> to vector<16x32xf32>
      %62 = arith.addf %59, %61 : vector<16x32xf32>
      %63 = arith.truncf %62 : vector<16x32xf32> to vector<16x32xbf16>
      %c0_32 = arith.constant 0 : index
      %c0_33 = arith.constant 0 : index
      %64 = vector.load %arg9[%c0_32, %c0_33] : memref<16x32xbf16, #tpu.memory_space<vmem>>, vector<16x32xbf16>
      tpu.vector_store %arg9[%c0_32, %c0_33], %63 {strides = array<i32>} : memref<16x32xbf16, #tpu.memory_space<vmem>>, vector<16x32xbf16>,
    } else {
    }
    return
  }
  func.func @transform_0(%arg0: i32, %arg1: i32) -> (i32, i32) {
    %c0_i32 = arith.constant 0 : i32
    %c0_i32_0 = arith.constant 0 : i32
    return %arg0, %c0_i32 : i32, i32
  }
  func.func @transform_1(%arg0: i32, %arg1: i32) -> (i32, i32) {
    %c0_i32 = arith.constant 0 : i32
    %c0_i32_0 = arith.constant 0 : i32
    return %c0_i32, %arg1 : i32, i32
  }
  func.func @transform_2(%arg0: i32, %arg1: i32) -> (i32, i32) {
    %c0_i32 = arith.constant 0 : i32
    %c0_i32_0 = arith.constant 0 : i32
    return %c0_i32, %arg1 : i32, i32
  }
  func.func @transform_3(%arg0: i32, %arg1: i32) -> (i32, i32) {
    %c0_i32 = arith.constant 0 : i32
    %c0_i32_0 = arith.constant 0 : i32
    return %arg1, %c0_i32 : i32, i32
  }
  func.func @transform_4(%arg0: i32, %arg1: i32) -> (i32, i32) {
    %c0_i32 = arith.constant 0 : i32
    %c0_i32_0 = arith.constant 0 : i32
    %c0_i32_1 = arith.constant 0 : i32
    return %c0_i32, %c0_i32_0 : i32, i32
  }
  func.func @transform_5(%arg0: i32, %arg1: i32) -> (i32, i32) {
    %c0_i32 = arith.constant 0 : i32
    %c0_i32_0 = arith.constant 0 : i32
    %c0_i32_1 = arith.constant 0 : i32
    return %c0_i32, %c0_i32_0 : i32, i32
  }
  func.func @transform_6(%arg0: i32, %arg1: i32) -> (i32, i32) {
    %c0_i32 = arith.constant 0 : i32
    %c0_i32_0 = arith.constant 0 : i32
    %c0_i32_1 = arith.constant 0 : i32
    return %c0_i32, %c0_i32_0 : i32, i32
  }
  func.func @transform_7(%arg0: i32, %arg1: i32) -> (i32, i32) {
    %c0_i32 = arith.constant 0 : i32
    %c0_i32_0 = arith.constant 0 : i32
    return %arg0, %c0_i32 : i32, i32
  }
}

module attributes {stable_mosaic.version = 11 : i64} {
  func.func @_ffn_res_ln_kernel(%arg0: i32, %arg1: i32, %arg2: memref<16x32xbf16, #tpu.memory_space<vmem>>, %arg3: memref<32x64xbf16, #tpu.memory_space<vmem>>, %arg4: memref<1x64xf32, #tpu.memory_space<vmem>>, %arg5: memref<64x32xbf16, #tpu.memory_space<vmem>>, %arg6: memref<1x32xf32, #tpu.memory_space<vmem>>, %arg7: memref<1x32xf32, #tpu.memory_space<vmem>>, %arg8: memref<1x32xf32, #tpu.memory_space<vmem>>, %arg9: memref<1x32xf32, #tpu.memory_space<vmem>>, %arg10: memref<1x1xf32, #tpu.memory_space<vmem>>, %arg11: memref<16x32xbf16, #tpu.memory_space<vmem>>, %arg12: memref<16x1xf32, #tpu.memory_space<vmem>>, %arg13: memref<16x32xf32, #tpu.memory_space<vmem>>) attributes {dimension_semantics = [#tpu.dimension_semantics<parallel>, #tpu.dimension_semantics<arbitrary>], iteration_bounds = array<i64: 1, 1>, scalar_prefetch = 0 : i64, scratch_operands = 1 : i64, tpu.core_type = #tpu.core_type<tc>, window_params = [{transform_indices = @transform_0, window_bounds = array<i64: 16, 32>}, {transform_indices = @transform_1, window_bounds = array<i64: 32, 64>}, {transform_indices = @transform_2, window_bounds = array<i64: 1, 64>}, {transform_indices = @transform_3, window_bounds = array<i64: 64, 32>}, {pipeline_mode = #tpu.pipeline_mode<synchronous>, transform_indices = @transform_4, window_bounds = array<i64: 1, 32>}, {pipeline_mode = #tpu.pipeline_mode<synchronous>, transform_indices = @transform_5, window_bounds = array<i64: 1, 32>}, {pipeline_mode = #tpu.pipeline_mode<synchronous>, transform_indices = @transform_6, window_bounds = array<i64: 1, 32>}, {pipeline_mode = #tpu.pipeline_mode<synchronous>, transform_indices = @transform_7, window_bounds = array<i64: 1, 32>}, {pipeline_mode = #tpu.pipeline_mode<synchronous>, transform_indices = @transform_8, window_bounds = array<i64: 1, 1>}, {transform_indices = @transform_9, window_bounds = array<i64: 16, 32>}, {transform_indices = @transform_10, window_bounds = array<i64: 16, 1>}]} {
    %c0_i32 = arith.constant 0 : i32
    %0 = arith.cmpi eq, %arg1, %c0_i32 : i32
    %1 = arith.extui %0 : i1 to i32
    %c0_i32_0 = arith.constant 0 : i32
    %2 = arith.cmpi ne, %1, %c0_i32_0 : i32
    scf.if %2 {
      %cst_19 = arith.constant 0.000000e+00 : f32
      %31 = vector.broadcast %cst_19 : f32 to vector<16x32xf32>
      %c0_20 = arith.constant 0 : index
      %c0_21 = arith.constant 0 : index
      %32 = vector.load %arg13[%c0_20, %c0_21] : memref<16x32xf32, #tpu.memory_space<vmem>>, vector<16x32xf32>
      tpu.vector_store %arg13[%c0_20, %c0_21], %31 {strides = array<i32>} : memref<16x32xf32, #tpu.memory_space<vmem>>, vector<16x32xf32>,
    } else {
    }
    %c0 = arith.constant 0 : index
    %c0_1 = arith.constant 0 : index
    %3 = vector.load %arg2[%c0, %c0_1] : memref<16x32xbf16, #tpu.memory_space<vmem>>, vector<16x32xbf16>
    %c0_2 = arith.constant 0 : index
    %c0_3 = arith.constant 0 : index
    %4 = vector.load %arg3[%c0_2, %c0_3] : memref<32x64xbf16, #tpu.memory_space<vmem>>, vector<32x64xbf16>
    %cst = arith.constant dense<0.000000e+00> : vector<16x64xf32>
    %5 = tpu.matmul %3, %4, %cst {dimension_numbers = #tpu.dot_dimension_numbers<[1], [0], [0], [1], [0, 0, 1, 1], [], []>} : vector<16x32xbf16>, vector<32x64xbf16>, vector<16x64xf32> -> vector<16x64xf32>
    %c0_4 = arith.constant 0 : index
    %c0_5 = arith.constant 0 : index
    %6 = vector.load %arg4[%c0_4, %c0_5] : memref<1x64xf32, #tpu.memory_space<vmem>>, vector<1x64xf32>
    %7 = vector.broadcast %6 : vector<1x64xf32> to vector<16x64xf32>
    %8 = arith.addf %5, %7 : vector<16x64xf32>
    %9 = arith.truncf %8 : vector<16x64xf32> to vector<16x64xbf16>
    %10 = arith.mulf %9, %9 : vector<16x64xbf16>
    %11 = arith.mulf %9, %10 : vector<16x64xbf16>
    %cst_6 = arith.constant 4.467770e-02 : bf16
    %12 = vector.broadcast %cst_6 : bf16 to vector<16x64xbf16>
    %13 = arith.mulf %12, %11 : vector<16x64xbf16>
    %14 = arith.addf %9, %13 : vector<16x64xbf16>
    %cst_7 = arith.constant 7.968750e-01 : bf16
    %15 = vector.broadcast %cst_7 : bf16 to vector<16x64xbf16>
    %16 = arith.mulf %15, %14 : vector<16x64xbf16>
    %17 = math.tanh %16 : vector<16x64xbf16>
    %cst_8 = arith.constant 1.000000e+00 : bf16
    %18 = vector.broadcast %cst_8 : bf16 to vector<16x64xbf16>
    %19 = arith.addf %18, %17 : vector<16x64xbf16>
    %cst_9 = arith.constant 5.000000e-01 : bf16
    %20 = vector.broadcast %cst_9 : bf16 to vector<16x64xbf16>
    %21 = arith.mulf %20, %19 : vector<16x64xbf16>
    %22 = arith.mulf %9, %21 : vector<16x64xbf16>
    %c0_10 = arith.constant 0 : index
    %c0_11 = arith.constant 0 : index
    %23 = vector.load %arg13[%c0_10, %c0_11] : memref<16x32xf32, #tpu.memory_space<vmem>>, vector<16x32xf32>
    %c0_12 = arith.constant 0 : index
    %c0_13 = arith.constant 0 : index
    %24 = vector.load %arg5[%c0_12, %c0_13] : memref<64x32xbf16, #tpu.memory_space<vmem>>, vector<64x32xbf16>
    %cst_14 = arith.constant dense<0.000000e+00> : vector<16x32xf32>
    %25 = tpu.matmul %22, %24, %cst_14 {dimension_numbers = #tpu.dot_dimension_numbers<[1], [0], [0], [1], [0, 0, 1, 1], [], []>} : vector<16x64xbf16>, vector<64x32xbf16>, vector<16x32xf32> -> vector<16x32xf32>
    %26 = arith.addf %23, %25 : vector<16x32xf32>
    %c0_15 = arith.constant 0 : index
    %c0_16 = arith.constant 0 : index
    %27 = vector.load %arg13[%c0_15, %c0_16] : memref<16x32xf32, #tpu.memory_space<vmem>>, vector<16x32xf32>
    tpu.vector_store %arg13[%c0_15, %c0_16], %26 {strides = array<i32>} : memref<16x32xf32, #tpu.memory_space<vmem>>, vector<16x32xf32>,
    %c0_i32_17 = arith.constant 0 : i32
    %28 = arith.cmpi eq, %arg1, %c0_i32_17 : i32
    %29 = arith.extui %28 : i1 to i32
    %c0_i32_18 = arith.constant 0 : i32
    %30 = arith.cmpi ne, %29, %c0_i32_18 : i32
    scf.if %30 {
      %c0_19 = arith.constant 0 : index
      %c0_20 = arith.constant 0 : index
      %31 = vector.load %arg13[%c0_19, %c0_20] : memref<16x32xf32, #tpu.memory_space<vmem>>, vector<16x32xf32>
      %c0_21 = arith.constant 0 : index
      %c0_22 = arith.constant 0 : index
      %32 = vector.load %arg6[%c0_21, %c0_22] : memref<1x32xf32, #tpu.memory_space<vmem>>, vector<1x32xf32>
      %33 = vector.broadcast %32 : vector<1x32xf32> to vector<16x32xf32>
      %34 = arith.addf %31, %33 : vector<16x32xf32>
      %35 = arith.extf %3 : vector<16x32xbf16> to vector<16x32xf32>
      %36 = arith.addf %34, %35 : vector<16x32xf32>
      %cst_23 = arith.constant dense<0.000000e+00> : vector<16xf32>
      %37 = vector.multi_reduction <add>, %36, %cst_23 [1] : vector<16x32xf32> to vector<16xf32>
      %38 = vector.shape_cast %37 : vector<16xf32> to vector<16x1xf32>
      %cst_24 = arith.constant 3.200000e+01 : f32
      %39 = vector.broadcast %cst_24 : f32 to vector<16x1xf32>
      %40 = arith.divf %38, %39 : vector<16x1xf32>
      %41 = vector.broadcast %40 : vector<16x1xf32> to vector<16x32xf32>
      %42 = arith.subf %36, %41 : vector<16x32xf32>
      %43 = vector.broadcast %40 : vector<16x1xf32> to vector<16x32xf32>
      %44 = arith.subf %36, %43 : vector<16x32xf32>
      %45 = arith.mulf %42, %44 : vector<16x32xf32>
      %cst_25 = arith.constant dense<0.000000e+00> : vector<16xf32>
      %46 = vector.multi_reduction <add>, %45, %cst_25 [1] : vector<16x32xf32> to vector<16xf32>
      %47 = vector.shape_cast %46 : vector<16xf32> to vector<16x1xf32>
      %cst_26 = arith.constant 3.200000e+01 : f32
      %48 = vector.broadcast %cst_26 : f32 to vector<16x1xf32>
      %49 = arith.divf %47, %48 : vector<16x1xf32>
      %50 = vector.broadcast %40 : vector<16x1xf32> to vector<16x32xf32>
      %51 = arith.subf %36, %50 : vector<16x32xf32>
      %cst_27 = arith.constant 9.99999996E-13 : f32
      %52 = vector.broadcast %cst_27 : f32 to vector<16x1xf32>
      %53 = arith.addf %49, %52 : vector<16x1xf32>
      %54 = math.rsqrt %53 : vector<16x1xf32>
      %55 = vector.broadcast %54 : vector<16x1xf32> to vector<16x32xf32>
      %56 = arith.mulf %51, %55 : vector<16x32xf32>
      %c0_28 = arith.constant 0 : index
      %c0_29 = arith.constant 0 : index
      %57 = vector.load %arg7[%c0_28, %c0_29] : memref<1x32xf32, #tpu.memory_space<vmem>>, vector<1x32xf32>
      %58 = vector.broadcast %57 : vector<1x32xf32> to vector<16x32xf32>
      %59 = arith.mulf %56, %58 : vector<16x32xf32>
      %c0_30 = arith.constant 0 : index
      %c0_31 = arith.constant 0 : index
      %60 = vector.load %arg8[%c0_30, %c0_31] : memref<1x32xf32, #tpu.memory_space<vmem>>, vector<1x32xf32>
      %61 = vector.broadcast %60 : vector<1x32xf32> to vector<16x32xf32>
      %62 = arith.addf %59, %61 : vector<16x32xf32>
      %63 = arith.truncf %62 : vector<16x32xf32> to vector<16x32xbf16>
      %c0_32 = arith.constant 0 : index
      %c0_33 = arith.constant 0 : index
      %64 = vector.load %arg11[%c0_32, %c0_33] : memref<16x32xbf16, #tpu.memory_space<vmem>>, vector<16x32xbf16>
      tpu.vector_store %arg11[%c0_32, %c0_33], %63 {strides = array<i32>} : memref<16x32xbf16, #tpu.memory_space<vmem>>, vector<16x32xbf16>,
      %c0_34 = arith.constant 0 : index
      %c0_35 = arith.constant 0 : index
      %65 = vector.load %arg9[%c0_34, %c0_35] : memref<1x32xf32, #tpu.memory_space<vmem>>, vector<1x32xf32>
      %66 = vector.broadcast %65 : vector<1x32xf32> to vector<16x32xf32>
      %67 = arith.mulf %62, %66 : vector<16x32xf32>
      %cst_36 = arith.constant dense<0.000000e+00> : vector<16xf32>
      %68 = vector.multi_reduction <add>, %67, %cst_36 [1] : vector<16x32xf32> to vector<16xf32>
      %69 = vector.shape_cast %68 : vector<16xf32> to vector<16x1xf32>
      %c0_37 = arith.constant 0 : index
      %c0_38 = arith.constant 0 : index
      %70 = vector.load %arg10[%c0_37, %c0_38] : memref<1x1xf32, #tpu.memory_space<vmem>>, vector<1x1xf32>
      %71 = vector.broadcast %70 : vector<1x1xf32> to vector<16x1xf32>
      %72 = arith.addf %69, %71 : vector<16x1xf32>
      %73 = arith.negf %72 : vector<16x1xf32>
      %74 = math.exp %73 : vector<16x1xf32>
      %cst_39 = arith.constant 1.000000e+00 : f32
      %75 = vector.broadcast %cst_39 : f32 to vector<16x1xf32>
      %76 = arith.addf %75, %74 : vector<16x1xf32>
      %77 = arith.divf %75, %76 : vector<16x1xf32>
      %c0_40 = arith.constant 0 : index
      %c0_41 = arith.constant 0 : index
      %78 = vector.load %arg12[%c0_40, %c0_41] : memref<16x1xf32, #tpu.memory_space<vmem>>, vector<16x1xf32>
      tpu.vector_store %arg12[%c0_40, %c0_41], %77 {strides = array<i32>} : memref<16x1xf32, #tpu.memory_space<vmem>>, vector<16x1xf32>,
    } else {
    }
    return
  }
  func.func @transform_0(%arg0: i32, %arg1: i32) -> (i32, i32) {
    %c0_i32 = arith.constant 0 : i32
    %c0_i32_0 = arith.constant 0 : i32
    return %arg0, %c0_i32 : i32, i32
  }
  func.func @transform_1(%arg0: i32, %arg1: i32) -> (i32, i32) {
    %c0_i32 = arith.constant 0 : i32
    %c0_i32_0 = arith.constant 0 : i32
    return %c0_i32, %arg1 : i32, i32
  }
  func.func @transform_2(%arg0: i32, %arg1: i32) -> (i32, i32) {
    %c0_i32 = arith.constant 0 : i32
    %c0_i32_0 = arith.constant 0 : i32
    return %c0_i32, %arg1 : i32, i32
  }
  func.func @transform_3(%arg0: i32, %arg1: i32) -> (i32, i32) {
    %c0_i32 = arith.constant 0 : i32
    %c0_i32_0 = arith.constant 0 : i32
    return %arg1, %c0_i32 : i32, i32
  }
  func.func @transform_4(%arg0: i32, %arg1: i32) -> (i32, i32) {
    %c0_i32 = arith.constant 0 : i32
    %c0_i32_0 = arith.constant 0 : i32
    %c0_i32_1 = arith.constant 0 : i32
    return %c0_i32, %c0_i32_0 : i32, i32
  }
  func.func @transform_5(%arg0: i32, %arg1: i32) -> (i32, i32) {
    %c0_i32 = arith.constant 0 : i32
    %c0_i32_0 = arith.constant 0 : i32
    %c0_i32_1 = arith.constant 0 : i32
    return %c0_i32, %c0_i32_0 : i32, i32
  }
  func.func @transform_6(%arg0: i32, %arg1: i32) -> (i32, i32) {
    %c0_i32 = arith.constant 0 : i32
    %c0_i32_0 = arith.constant 0 : i32
    %c0_i32_1 = arith.constant 0 : i32
    return %c0_i32, %c0_i32_0 : i32, i32
  }
  func.func @transform_7(%arg0: i32, %arg1: i32) -> (i32, i32) {
    %c0_i32 = arith.constant 0 : i32
    %c0_i32_0 = arith.constant 0 : i32
    %c0_i32_1 = arith.constant 0 : i32
    return %c0_i32, %c0_i32_0 : i32, i32
  }
  func.func @transform_8(%arg0: i32, %arg1: i32) -> (i32, i32) {
    %c0_i32 = arith.constant 0 : i32
    %c0_i32_0 = arith.constant 0 : i32
    %c0_i32_1 = arith.constant 0 : i32
    return %c0_i32, %c0_i32_0 : i32, i32
  }
  func.func @transform_9(%arg0: i32, %arg1: i32) -> (i32, i32) {
    %c0_i32 = arith.constant 0 : i32
    %c0_i32_0 = arith.constant 0 : i32
    return %arg0, %c0_i32 : i32, i32
  }
  func.func @transform_10(%arg0: i32, %arg1: i32) -> (i32, i32) {
    %c0_i32 = arith.constant 0 : i32
    %c0_i32_0 = arith.constant 0 : i32
    return %arg0, %c0_i32 : i32, i32
  }
}

module attributes {stable_mosaic.version = 11 : i64} {
  func.func @_pooler_cls_kernel(%arg0: i32, %arg1: memref<2x32xbf16, #tpu.memory_space<vmem>>, %arg2: memref<32x32xbf16, #tpu.memory_space<vmem>>, %arg3: memref<1x32xf32, #tpu.memory_space<vmem>>, %arg4: memref<32x3xbf16, #tpu.memory_space<vmem>>, %arg5: memref<1x3xf32, #tpu.memory_space<vmem>>, %arg6: memref<2x3xf32, #tpu.memory_space<vmem>>) attributes {dimension_semantics = [#tpu.dimension_semantics<parallel>], iteration_bounds = array<i64: 1>, scalar_prefetch = 0 : i64, scratch_operands = 0 : i64, tpu.core_type = #tpu.core_type<tc>, window_params = [{pipeline_mode = #tpu.pipeline_mode<synchronous>, transform_indices = @transform_0, window_bounds = array<i64: 2, 32>}, {pipeline_mode = #tpu.pipeline_mode<synchronous>, transform_indices = @transform_1, window_bounds = array<i64: 32, 32>}, {pipeline_mode = #tpu.pipeline_mode<synchronous>, transform_indices = @transform_2, window_bounds = array<i64: 1, 32>}, {pipeline_mode = #tpu.pipeline_mode<synchronous>, transform_indices = @transform_3, window_bounds = array<i64: 32, 3>}, {pipeline_mode = #tpu.pipeline_mode<synchronous>, transform_indices = @transform_4, window_bounds = array<i64: 1, 3>}, {pipeline_mode = #tpu.pipeline_mode<synchronous>, transform_indices = @transform_5, window_bounds = array<i64: 2, 3>}]} {
    %c0 = arith.constant 0 : index
    %c0_0 = arith.constant 0 : index
    %0 = vector.load %arg1[%c0, %c0_0] : memref<2x32xbf16, #tpu.memory_space<vmem>>, vector<2x32xbf16>
    %c0_1 = arith.constant 0 : index
    %c0_2 = arith.constant 0 : index
    %1 = vector.load %arg2[%c0_1, %c0_2] : memref<32x32xbf16, #tpu.memory_space<vmem>>, vector<32x32xbf16>
    %cst = arith.constant dense<0.000000e+00> : vector<2x32xf32>
    %2 = tpu.matmul %0, %1, %cst {dimension_numbers = #tpu.dot_dimension_numbers<[1], [0], [0], [1], [0, 0, 1, 1], [], []>} : vector<2x32xbf16>, vector<32x32xbf16>, vector<2x32xf32> -> vector<2x32xf32>
    %c0_3 = arith.constant 0 : index
    %c0_4 = arith.constant 0 : index
    %3 = vector.load %arg3[%c0_3, %c0_4] : memref<1x32xf32, #tpu.memory_space<vmem>>, vector<1x32xf32>
    %4 = vector.broadcast %3 : vector<1x32xf32> to vector<2x32xf32>
    %5 = arith.addf %2, %4 : vector<2x32xf32>
    %6 = math.tanh %5 : vector<2x32xf32>
    %7 = arith.truncf %6 : vector<2x32xf32> to vector<2x32xbf16>
    %c0_5 = arith.constant 0 : index
    %c0_6 = arith.constant 0 : index
    %8 = vector.load %arg4[%c0_5, %c0_6] : memref<32x3xbf16, #tpu.memory_space<vmem>>, vector<32x3xbf16>
    %cst_7 = arith.constant dense<0.000000e+00> : vector<2x3xf32>
    %9 = tpu.matmul %7, %8, %cst_7 {dimension_numbers = #tpu.dot_dimension_numbers<[1], [0], [0], [1], [0, 0, 1, 1], [], []>} : vector<2x32xbf16>, vector<32x3xbf16>, vector<2x3xf32> -> vector<2x3xf32>
    %c0_8 = arith.constant 0 : index
    %c0_9 = arith.constant 0 : index
    %10 = vector.load %arg5[%c0_8, %c0_9] : memref<1x3xf32, #tpu.memory_space<vmem>>, vector<1x3xf32>
    %11 = vector.broadcast %10 : vector<1x3xf32> to vector<2x3xf32>
    %12 = arith.addf %9, %11 : vector<2x3xf32>
    %13 = arith.negf %12 : vector<2x3xf32>
    %14 = math.exp %13 : vector<2x3xf32>
    %cst_10 = arith.constant 1.000000e+00 : f32
    %15 = vector.broadcast %cst_10 : f32 to vector<2x3xf32>
    %16 = arith.addf %15, %14 : vector<2x3xf32>
    %17 = arith.divf %15, %16 : vector<2x3xf32>
    %c0_11 = arith.constant 0 : index
    %c0_12 = arith.constant 0 : index
    %18 = vector.load %arg6[%c0_11, %c0_12] : memref<2x3xf32, #tpu.memory_space<vmem>>, vector<2x3xf32>
    tpu.vector_store %arg6[%c0_11, %c0_12], %17 {strides = array<i32>} : memref<2x3xf32, #tpu.memory_space<vmem>>, vector<2x3xf32>,
    return
  }
  func.func @transform_0(%arg0: i32) -> (i32, i32) {
    %c0_i32 = arith.constant 0 : i32
    %c0_i32_0 = arith.constant 0 : i32
    %c0_i32_1 = arith.constant 0 : i32
    return %c0_i32, %c0_i32_0 : i32, i32
  }
  func.func @transform_1(%arg0: i32) -> (i32, i32) {
    %c0_i32 = arith.constant 0 : i32
    %c0_i32_0 = arith.constant 0 : i32
    %c0_i32_1 = arith.constant 0 : i32
    return %c0_i32, %c0_i32_0 : i32, i32
  }
  func.func @transform_2(%arg0: i32) -> (i32, i32) {
    %c0_i32 = arith.constant 0 : i32
    %c0_i32_0 = arith.constant 0 : i32
    %c0_i32_1 = arith.constant 0 : i32
    return %c0_i32, %c0_i32_0 : i32, i32
  }
  func.func @transform_3(%arg0: i32) -> (i32, i32) {
    %c0_i32 = arith.constant 0 : i32
    %c0_i32_0 = arith.constant 0 : i32
    %c0_i32_1 = arith.constant 0 : i32
    return %c0_i32, %c0_i32_0 : i32, i32
  }
  func.func @transform_4(%arg0: i32) -> (i32, i32) {
    %c0_i32 = arith.constant 0 : i32
    %c0_i32_0 = arith.constant 0 : i32
    %c0_i32_1 = arith.constant 0 : i32
    return %c0_i32, %c0_i32_0 : i32, i32
  }
  func.func @transform_5(%arg0: i32) -> (i32, i32) {
    %c0_i32 = arith.constant 0 : i32
    %c0_i32_0 = arith.constant 0 : i32
    %c0_i32_1 = arith.constant 0 : i32
    return %c0_i32, %c0_i32_0 : i32, i32
  }
}

</mosaic_0001>

<llo_original>
// kernel: flat_bert_multitask_forward.10
$region0: #{flat_bert_multitask_forward.10}
  #allocation0 [shape = 'u32[]', space=smem, size = 0x4, offset = 0x4, fixed_abs, tag = 'smem constant byte address 0x4 - core index']
  #allocation1 [shape = 'u32[144,128]{1,0:T(1,128)}', space=vmem, size = 0x12000, scoped, tag = 'internal scratch']
  %s0 = inlined_call_operand.vmem [shape: bf16[16,32], index: 0, kind: input, shape index: {}]
  %s1 = inlined_call_operand.vmem [shape: bf16[32,32], index: 1, kind: input, shape index: {}]
  %s2 = inlined_call_operand.vmem [shape: f32[1,32], index: 2, kind: input, shape index: {}]
  %s3 = inlined_call_operand.vmem [shape: bf16[16,32], index: 3, kind: input, shape index: {}]
  %s4 = inlined_call_operand.vmem [shape: f32[1,32], index: 4, kind: input, shape index: {}]
  %s5 = inlined_call_operand.vmem [shape: f32[1,32], index: 5, kind: input, shape index: {}]
  %s6 = inlined_call_operand.vmem [shape: bf16[16,32], index: 6, kind: output, shape index: {}]
  %s7 = sld [smem:[#allocation0]]
  $region34: #{flat_bert_multitask_forward.10} parent=0
    _
  %s9 = ssub.s32 1, %s7
  %s10 = scalar_select 0, %s9, %s7
  // Predicated region
  $region2: #{flat_bert_multitask_forward.10} parent=0 // pred_check
    _
  $region3: #{flat_bert_multitask_forward.10} parent=0 // pred_check_branch
    %12 = sbr.rel (0) target = $region5
  $region4: #{flat_bert_multitask_forward.10} parent=0 // pred_region
    _
  $region5: #{flat_bert_multitask_forward.10} parent=0 // pred_fallthru
    _
  // Predicated region
  $region6: #{flat_bert_multitask_forward.10} parent=0 // pred_check
    _
  $region7: #{flat_bert_multitask_forward.10} parent=0 // pred_check_branch
    %14 = sbr.rel (0) target = $region9
  $region8: #{flat_bert_multitask_forward.10} parent=0 // pred_region
    _
  $region9: #{flat_bert_multitask_forward.10} parent=0 // pred_fallthru
    _
  // Predicated region
  $region10: #{flat_bert_multitask_forward.10} parent=0 // pred_check
    _
  $region11: #{flat_bert_multitask_forward.10} parent=0 // pred_check_branch
    %16 = sbr.rel (0) target = $region13
  $region12: #{flat_bert_multitask_forward.10} parent=0 // pred_region
    _
  $region13: #{flat_bert_multitask_forward.10} parent=0 // pred_fallthru
    _
  // Predicated region
  $region14: #{flat_bert_multitask_forward.10} parent=0 // pred_check
    _
  $region15: #{flat_bert_multitask_forward.10} parent=0 // pred_check_branch
    %18 = sbr.rel (0) target = $region17
  $region16: #{flat_bert_multitask_forward.10} parent=0 // pred_region
    _
  $region17: #{flat_bert_multitask_forward.10} parent=0 // pred_fallthru
    _
  // Predicated region
  $region18: #{flat_bert_multitask_forward.10} parent=0 // pred_check
    _
  $region19: #{flat_bert_multitask_forward.10} parent=0 // pred_check_branch
    %20 = sbr.rel (0) target = $region21
  $region20: #{flat_bert_multitask_forward.10} parent=0 // pred_region
    _
  $region21: #{flat_bert_multitask_forward.10} parent=0 // pred_fallthru
    _
  // Predicated region
  $region22: #{flat_bert_multitask_forward.10} parent=0 // pred_check
    _
  $region23: #{flat_bert_multitask_forward.10} parent=0 // pred_check_branch
    %22 = sbr.rel (0) target = $region25
  $region24: #{flat_bert_multitask_forward.10} parent=0 // pred_region
    _
  $region25: #{flat_bert_multitask_forward.10} parent=0 // pred_fallthru
    _
  %v24 = vld [vmem:[%s0] sm:$0xf]
  %v25 = vld [vmem:[%s0 + $0x4] sm:$0xf]
  %v26 = vld [vmem:[%s1] sm:$0xf]
  %v27 = vld [vmem:[%s1 + $0x4] sm:$0xf]
  %v28 = vld [vmem:[%s1 + $0x8] sm:$0xf]
  %v29 = vld [vmem:[%s1 + $0xc] sm:$0xf]
  %v30 = vld [vmem:[%s2] sm:$0x1]
  %v32 = vlaneseq
  %v33 = vshrl.u32 %v32, 7
  %v34 = vsub.s32 0, %v33
  %v35 = vrot.slane %v30, %v34
  %v39 = vunpack.c.l.b16 %v24
  %v40 = vunpack.c.l.b16 %v25
  %v41 = vpack.c.b16 %v40, %v39
  %v46 = vunpack.c.l.b16 %v26
  %v47 = vunpack.c.l.b16 %v27
  %v48 = vunpack.c.l.b16 %v28
  %v49 = vunpack.c.l.b16 %v29
  %v50 = vpack.c.b16 %v47, %v46
  %v51 = vpack.c.b16 %v49, %v48
  %vm54 = vcmask 261120
  %v56 = vsel %vm54, %v41, 0
  %58 = vmatprep.subr.bf16.mxu0 0
  %59 = vmatpush1.bf16.msra.mxu0 %v50
  %60 = vmatprep.subr.bf16.mxu0 0
  %61 = vmatpush1.bf16.msra.mxu0 %v51
  %62 = vmatprep.subr.bf16.mxu0 0
  %63 = vmatpush1.bf16.msra.mxu0 0
  %64 = vmatprep.subr.bf16.mxu0 0
  %65 = vmatpush1.bf16.msra.mxu0 0
  %66 = vmatprep.subr.bf16.mxu0 0
  %67 = vmatpush1.bf16.msra.mxu0 0
  %68 = vmatprep.subr.bf16.mxu0 0
  %69 = vmatpush1.bf16.msra.mxu0 0
  %70 = vmatprep.subr.bf16.mxu0 0
  %71 = vmatpush1.bf16.msra.mxu0 0
  %72 = vmatprep.subr.bf16.mxu0 0
  %73 = vmatpush1.bf16.msra.mxu0 0
  %74 = vmatprep.subr.bf16.mxu0 0
  %75 = vmatpush1.bf16.msra.mxu0 0
  %76 = vmatprep.subr.bf16.mxu0 0
  %77 = vmatpush1.bf16.msra.mxu0 0
  %78 = vmatprep.subr.bf16.mxu0 0
  %79 = vmatpush1.bf16.msra.mxu0 0
  %80 = vmatprep.subr.bf16.mxu0 0
  %81 = vmatpush1.bf16.msra.mxu0 0
  %82 = vmatprep.subr.bf16.mxu0 0
  %83 = vmatpush1.bf16.msra.mxu0 0
  %84 = vmatprep.subr.bf16.mxu0 0
  %85 = vmatpush1.bf16.msra.mxu0 0
  %86 = vmatprep.subr.bf16.mxu0 0
  %87 = vmatpush1.bf16.msra.mxu0 0
  %88 = vmatprep.subr.bf16.mxu0 0
  %89 = vmatpush1.bf16.msra.mxu0 0
  %90 = vmatprep.mubr.bf16.mxu0 0
  %91 = vmatmul.mubr.bf16.gmra.mrb[0].mxu0 %v56
  %v92 = vpop.f32.mrb[0].mxu0
  %v93 = vadd.f32 %v35, %v92
  %v94 = vpop.f32.mrb[0].mxu0
  %v95 = vpop.f32.mrb[0].mxu0
  %v96 = vadd.f32 %v35, %v95
  %v97 = vpop.f32.mrb[0].mxu0
  %98 = vdwg.mxu0
  %v99 = vld [vmem:[%s3] sm:$0xf]
  %v100 = vld [vmem:[%s3 + $0x4] sm:$0xf]
  %v101 = vunpack.c.l.bf16 %v99
  %v102 = vunpack.c.l.bf16 %v100
  %v103 = vadd.f32 %v93, %v101
  %v104 = vadd.f32 %v96, %v102
  %v105 = vsel %vm54, %v103, 0.0
  %106 = vadd.xlane.f32.xlu0 %v105
  %v107 = vpop.xlane.xlu0 %106
  %v108 = vsel %vm54, %v104, 0.0
  %109 = vadd.xlane.f32.xlu0 %v108
  %v110 = vpop.xlane.xlu0 %109
  %v111 = vrcp.pop 32.0
  %v112 = vmul.f32 %v107, %v111
  %v113 = vmul.f32 %v110, %v111
  %v114 = vsub.f32 %v103, %v112
  %v115 = vsub.f32 %v104, %v113
  %v116 = vmul.f32 %v114, %v114
  %v117 = vmul.f32 %v115, %v115
  %v118 = vsel %vm54, %v116, 0.0
  %119 = vadd.xlane.f32.xlu0 %v118
  %v120 = vpop.xlane.xlu0 %119
  %v121 = vsel %vm54, %v117, 0.0
  %122 = vadd.xlane.f32.xlu0 %v121
  %v123 = vpop.xlane.xlu0 %122
  %v124 = vmul.f32 %v120, %v111
  %v125 = vmul.f32 %v123, %v111
  %v126 = vadd.f32 %v124, 1e-12
  %v127 = vadd.f32 %v125, 1e-12
  %v128 = vrsqrt.pop %v126
  %v129 = vrsqrt.pop %v127
  %v130 = vmul.f32 %v114, %v128
  %v131 = vmul.f32 %v115, %v129
  %v132 = vld [vmem:[%s4] sm:$0x1]
  %v134 = vlaneseq
  %v135 = vshrl.u32 %v134, 7
  %v136 = vsub.s32 0, %v135
  %v137 = vrot.slane %v132, %v136
  %v139 = vmul.f32 %v130, %v137
  %v140 = vmul.f32 %v131, %v137
  %v141 = vld [vmem:[%s5] sm:$0x1]
  %v143 = vlaneseq
  %v144 = vshrl.u32 %v143, 7
  %v145 = vsub.s32 0, %v144
  %v146 = vrot.slane %v141, %v145
  %v148 = vadd.f32 %v139, %v146
  %v149 = vadd.f32 %v140, %v146
  %v150 = vpack.c.bf16 %v149, %v148
  %v152 = vunpack.c.l.b16 %v150
  %v153 = vunpack.c.h.b16 %v150
  %v154 = vpack.c.b16 %v152, %v152
  %v155 = vpack.c.b16 %v153, %v153
  %vm158 = vcmask 257024
  %159 = vst.msk [vmem:[%s6] sm:$0xf] %vm158, %v154
  %160 = vst.msk [vmem:[%s6 + $0x4] sm:$0xf] %vm158, %v155
  // Predicated region
  $region26: #{flat_bert_multitask_forward.10} parent=0 // pred_check
    _
  $region27: #{flat_bert_multitask_forward.10} parent=0 // pred_check_branch
    %162 = sbr.rel (0) target = $region29
  $region28: #{flat_bert_multitask_forward.10} parent=0 // pred_region
    _
  $region29: #{flat_bert_multitask_forward.10} parent=0 // pred_fallthru
    _
  // Predicated region
  $region30: #{flat_bert_multitask_forward.10} parent=0 // pred_check
    _
  $region31: #{flat_bert_multitask_forward.10} parent=0 // pred_check_branch
    %164 = sbr.rel (0) target = $region33
  $region32: #{flat_bert_multitask_forward.10} parent=0 // pred_region
    _
  $region33: #{flat_bert_multitask_forward.10} parent=0 // pred_fallthru
    _

// kernel: flat_bert_multitask_forward.8
$region0: #{flat_bert_multitask_forward.8}
  #allocation0 [shape = 'u32[]', space=smem, size = 0x4, offset = 0x4, fixed_abs, tag = 'smem constant byte address 0x4 - core index']
  #allocation1 [shape = 'u32[144,128]{1,0:T(1,128)}', space=vmem, size = 0x12000, scoped, tag = 'internal scratch']
  %s0 = inlined_call_operand.vmem [shape: f32[16,32], index: 0, kind: input, shape index: {}]
  %s1 = inlined_call_operand.vmem [shape: f32[1,32], index: 1, kind: input, shape index: {}]
  %s2 = inlined_call_operand.vmem [shape: f32[1,32], index: 2, kind: input, shape index: {}]
  %s3 = inlined_call_operand.vmem [shape: bf16[16,32], index: 3, kind: output, shape index: {}]
  %s4 = sld [smem:[#allocation0]]
  $region22: #{flat_bert_multitask_forward.8} parent=0
    _
  %s6 = ssub.s32 1, %s4
  %s7 = scalar_select 0, %s6, %s4
  // Predicated region
  $region2: #{flat_bert_multitask_forward.8} parent=0 // pred_check
    _
  $region3: #{flat_bert_multitask_forward.8} parent=0 // pred_check_branch
    %9 = sbr.rel (0) target = $region5
  $region4: #{flat_bert_multitask_forward.8} parent=0 // pred_region
    _
  $region5: #{flat_bert_multitask_forward.8} parent=0 // pred_fallthru
    _
  // Predicated region
  $region6: #{flat_bert_multitask_forward.8} parent=0 // pred_check
    _
  $region7: #{flat_bert_multitask_forward.8} parent=0 // pred_check_branch
    %11 = sbr.rel (0) target = $region9
  $region8: #{flat_bert_multitask_forward.8} parent=0 // pred_region
    _
  $region9: #{flat_bert_multitask_forward.8} parent=0 // pred_fallthru
    _
  // Predicated region
  $region10: #{flat_bert_multitask_forward.8} parent=0 // pred_check
    _
  $region11: #{flat_bert_multitask_forward.8} parent=0 // pred_check_branch
    %13 = sbr.rel (0) target = $region13
  $region12: #{flat_bert_multitask_forward.8} parent=0 // pred_region
    _
  $region13: #{flat_bert_multitask_forward.8} parent=0 // pred_fallthru
    _
  %v14 = vld [vmem:[%s0] sm:$0xff]
  %v15 = vld [vmem:[%s0 + $0x8] sm:$0xff]
  %vm16 = vcmask 261120
  %v17 = vsel %vm16, %v14, 0.0
  %18 = vadd.xlane.f32.xlu0 %v17
  %v19 = vpop.xlane.xlu0 %18
  %v20 = vsel %vm16, %v15, 0.0
  %21 = vadd.xlane.f32.xlu0 %v20
  %v22 = vpop.xlane.xlu0 %21
  %v23 = vrcp.pop 32.0
  %v24 = vmul.f32 %v19, %v23
  %v25 = vmul.f32 %v22, %v23
  %v26 = vsub.f32 %v14, %v24
  %v27 = vsub.f32 %v15, %v25
  %v28 = vmul.f32 %v26, %v26
  %v29 = vmul.f32 %v27, %v27
  %v30 = vsel %vm16, %v28, 0.0
  %31 = vadd.xlane.f32.xlu0 %v30
  %v32 = vpop.xlane.xlu0 %31
  %v33 = vsel %vm16, %v29, 0.0
  %34 = vadd.xlane.f32.xlu0 %v33
  %v35 = vpop.xlane.xlu0 %34
  %v36 = vmul.f32 %v32, %v23
  %v37 = vmul.f32 %v35, %v23
  %v38 = vadd.f32 %v36, 1e-12
  %v39 = vadd.f32 %v37, 1e-12
  %v40 = vrsqrt.pop %v38
  %v41 = vrsqrt.pop %v39
  %v42 = vmul.f32 %v26, %v40
  %v43 = vmul.f32 %v27, %v41
  %v44 = vld [vmem:[%s1] sm:$0x1]
  %v46 = vlaneseq
  %v47 = vshrl.u32 %v46, 7
  %v48 = vsub.s32 0, %v47
  %v49 = vrot.slane %v44, %v48
  %v51 = vmul.f32 %v42, %v49
  %v52 = vmul.f32 %v43, %v49
  %v53 = vld [vmem:[%s2] sm:$0x1]
  %v55 = vlaneseq
  %v56 = vshrl.u32 %v55, 7
  %v57 = vsub.s32 0, %v56
  %v58 = vrot.slane %v53, %v57
  %v60 = vadd.f32 %v51, %v58
  %v61 = vadd.f32 %v52, %v58
  %v62 = vpack.c.bf16 %v61, %v60
  %v64 = vunpack.c.l.b16 %v62
  %v65 = vunpack.c.h.b16 %v62
  %v66 = vpack.c.b16 %v64, %v64
  %v67 = vpack.c.b16 %v65, %v65
  %vm70 = vcmask 257024
  %71 = vst.msk [vmem:[%s3] sm:$0xf] %vm70, %v66
  %72 = vst.msk [vmem:[%s3 + $0x4] sm:$0xf] %vm70, %v67
  // Predicated region
  $region14: #{flat_bert_multitask_forward.8} parent=0 // pred_check
    _
  $region15: #{flat_bert_multitask_forward.8} parent=0 // pred_check_branch
    %74 = sbr.rel (0) target = $region17
  $region16: #{flat_bert_multitask_forward.8} parent=0 // pred_region
    _
  $region17: #{flat_bert_multitask_forward.8} parent=0 // pred_fallthru
    _
  // Predicated region
  $region18: #{flat_bert_multitask_forward.8} parent=0 // pred_check
    _
  $region19: #{flat_bert_multitask_forward.8} parent=0 // pred_check_branch
    %76 = sbr.rel (0) target = $region21
  $region20: #{flat_bert_multitask_forward.8} parent=0 // pred_region
    _
  $region21: #{flat_bert_multitask_forward.8} parent=0 // pred_fallthru
    _

// kernel: flat_bert_multitask_forward.9
$region0: #{flat_bert_multitask_forward.9}
  #allocation0 [shape = 'u32[]', space=smem, size = 0x4, offset = 0x4, fixed_abs, tag = 'smem constant byte address 0x4 - core index']
  #allocation1 [shape = 'u32[144,128]{1,0:T(1,128)}', space=vmem, size = 0x12000, scoped, tag = 'internal scratch']
  %s0 = inlined_call_operand.vmem [shape: bf16[16,32], index: 0, kind: input, shape index: {}]
  %s1 = inlined_call_operand.vmem [shape: bf16[1,32,96], index: 1, kind: input, shape index: {}]
  %s2 = inlined_call_operand.vmem [shape: f32[1,1,96], index: 2, kind: input, shape index: {}]
  %s3 = inlined_call_operand.vmem [shape: f32[2,1,8], index: 3, kind: input, shape index: {}]
  %s4 = inlined_call_operand.vmem [shape: bf16[16,32], index: 4, kind: output, shape index: {}]
  %s5 = sld [smem:[#allocation0]]
  $region49: #{flat_bert_multitask_forward.9} parent=0
    _
  %s7 = ssub.s32 1, %s5
  %s8 = scalar_select 0, %s7, %s5
  loop: start=0, step=1, limit=4
  $region2: #{flat_bert_multitask_forward.9} parent=0 // loop_pre_header
    _
  $region3: #{flat_bert_multitask_forward.9} parent=0 // loop_header
    %s10 = sphi 0, %s14
    %p11 = scmp.ge.s32.totalorder %s10, 4
    %s17 = sphi 0, %s29
    %s18 = sphi 0, %s25
    %s19 = sphi 0, %s17
    %s20 = sphi 0, %s18
    %s21 = sphi 0, %s19
    %s22 = sphi 0, %s20
    %s32 = sphi 0, %s34
    %s35 = sphi 0, %s32
    %s36 = sphi 0, %s35
    %s52 = sphi 0, %s36
    %s58 = sphi 0, %s60
    %s61 = sphi 0, %s58
    %s62 = sphi 0, %s61
    %s78 = sphi 0, %s62
    %s84 = sphi 0, %s86
    %s87 = sphi 0, %s84
    %s88 = sphi 0, %s87
    %s104 = sphi 0, %s88
    %s110 = sphi 0, %s112
    %s113 = sphi 0, %s110
    %s114 = sphi 0, %s113
    %s130 = sphi 0, %s114
    %s138 = sphi 0, %s140
    %s141 = sphi 0, %s138
    %s142 = sphi 0, %s141
    %s158 = sphi 0, %s142
  $region4: #{flat_bert_multitask_forward.9} parent=0 // loop_header_branch
    %13 = sbr.rel (%p11) target = $region8
  $region5: #{flat_bert_multitask_forward.9} parent=0 // loop_body
    %s15 = ssub.s32 %s10, 1
    %s16 = ssub.s32 %s10, 2
    %s23 = sadd.s32 1, %s18
    %p24 = scmp.ge.s32.totalorder %s23, 1
    %s25 = scalar_select %p24, 0, %s23
    %s26 = sadd.s32 1, %s17
    %s27 = scalar_select %p24, %s26, %s17
    %p28 = scmp.ge.s32.totalorder %s27, 2
    %s29 = scalar_select %p28, 0, %s27
    %s30 = ssub.s32 %s17, %s29
    %p31 = scmp.eq.s32.totalorder %s30, 0
    %s33 = sadd.s32 %s32, 1
    %s34 = scalar_select %p31, %s32, %s33
    %p37 = pneg %p31
    %p38 = scmp.eq.s32.totalorder %s10, 1
    %p39 = por %p37, %p38
    %p40 = scmp.ne.s32.totalorder %s32, %s35
    %p41 = scmp.eq.s32.totalorder %s10, 0
    %p42 = por %p40, %p41
    %p43 = scmp.ne.s32.totalorder %s32, %s35
    %p44 = scmp.eq.s32.totalorder %s15, 1
    %p45 = por %p43, %p44
    %p46 = scmp.ne.s32.totalorder %s35, %s36
    %p47 = scmp.eq.s32.totalorder %s15, 0
    %p48 = por %p46, %p47
    %p49 = scmp.ne.s32.totalorder %s35, %s36
    %p50 = scmp.eq.s32.totalorder %s16, 1
    %p51 = por %p49, %p50
    %p53 = scmp.ne.s32.totalorder %s36, %s52
    %p54 = scmp.eq.s32.totalorder %s16, 0
    %p55 = por %p53, %p54
    %s56 = ssub.s32 %s18, %s25
    %p57 = scmp.eq.s32.totalorder %s56, 0
    %s59 = sadd.s32 %s58, 1
    %s60 = scalar_select %p57, %s58, %s59
    %p63 = pneg %p57
    %p64 = scmp.eq.s32.totalorder %s10, 1
    %p65 = por %p63, %p64
    %p66 = scmp.ne.s32.totalorder %s58, %s61
    %p67 = scmp.eq.s32.totalorder %s10, 0
    %p68 = por %p66, %p67
    %p69 = scmp.ne.s32.totalorder %s58, %s61
    %p70 = scmp.eq.s32.totalorder %s15, 1
    %p71 = por %p69, %p70
    %p72 = scmp.ne.s32.totalorder %s61, %s62
    %p73 = scmp.eq.s32.totalorder %s15, 0
    %p74 = por %p72, %p73
    %p75 = scmp.ne.s32.totalorder %s61, %s62
    %p76 = scmp.eq.s32.totalorder %s16, 1
    %p77 = por %p75, %p76
    %p79 = scmp.ne.s32.totalorder %s62, %s78
    %p80 = scmp.eq.s32.totalorder %s16, 0
    %p81 = por %p79, %p80
    %s82 = ssub.s32 %s18, %s25
    %p83 = scmp.eq.s32.totalorder %s82, 0
    %s85 = sadd.s32 %s84, 1
    %s86 = scalar_select %p83, %s84, %s85
    %p89 = pneg %p83
    %p90 = scmp.eq.s32.totalorder %s10, 1
    %p91 = por %p89, %p90
    %p92 = scmp.ne.s32.totalorder %s84, %s87
    %p93 = scmp.eq.s32.totalorder %s10, 0
    %p94 = por %p92, %p93
    %p95 = scmp.ne.s32.totalorder %s84, %s87
    %p96 = scmp.eq.s32.totalorder %s15, 1
    %p97 = por %p95, %p96
    %p98 = scmp.ne.s32.totalorder %s87, %s88
    %p99 = scmp.eq.s32.totalorder %s15, 0
    %p100 = por %p98, %p99
    %p101 = scmp.ne.s32.totalorder %s87, %s88
    %p102 = scmp.eq.s32.totalorder %s16, 1
    %p103 = por %p101, %p102
    %p105 = scmp.ne.s32.totalorder %s88, %s104
    %p106 = scmp.eq.s32.totalorder %s16, 0
    %p107 = por %p105, %p106
    %s108 = ssub.s32 %s17, %s29
    %p109 = scmp.eq.s32.totalorder %s108, 0
    %s111 = sadd.s32 %s110, 1
    %s112 = scalar_select %p109, %s110, %s111
    %p115 = pneg %p109
    %p116 = scmp.eq.s32.totalorder %s10, 1
    %p117 = por %p115, %p116
    %p118 = scmp.ne.s32.totalorder %s110, %s113
    %p119 = scmp.eq.s32.totalorder %s10, 0
    %p120 = por %p118, %p119
    %p121 = scmp.ne.s32.totalorder %s110, %s113
    %p122 = scmp.eq.s32.totalorder %s15, 1
    %p123 = por %p121, %p122
    %p124 = scmp.ne.s32.totalorder %s113, %s114
    %p125 = scmp.eq.s32.totalorder %s15, 0
    %p126 = por %p124, %p125
    %p127 = scmp.ne.s32.totalorder %s113, %s114
    %p128 = scmp.eq.s32.totalorder %s16, 1
    %p129 = por %p127, %p128
    %p131 = scmp.ne.s32.totalorder %s114, %s130
    %p132 = scmp.eq.s32.totalorder %s16, 0
    %p133 = por %p131, %p132
    %s134 = ssub.s32 %s17, %s29
    %s135 = ssub.s32 %s18, %s25
    %s136 = sor.u32 %s134, %s135
    %p137 = scmp.eq.s32.totalorder %s136, 0
    %s139 = sadd.s32 %s138, 1
    %s140 = scalar_select %p137, %s138, %s139
    %p143 = pneg %p137
    %p144 = scmp.eq.s32.totalorder %s10, 1
    %p145 = por %p143, %p144
    %p146 = scmp.ne.s32.totalorder %s138, %s141
    %p147 = scmp.eq.s32.totalorder %s10, 0
    %p148 = por %p146, %p147
    %p149 = scmp.ne.s32.totalorder %s138, %s141
    %p150 = scmp.eq.s32.totalorder %s15, 1
    %p151 = por %p149, %p150
    %p152 = scmp.ne.s32.totalorder %s141, %s142
    %p153 = scmp.eq.s32.totalorder %s15, 0
    %p154 = por %p152, %p153
    %p155 = scmp.ne.s32.totalorder %s141, %s142
    %p156 = scmp.eq.s32.totalorder %s16, 1
    %p157 = por %p155, %p156
    %p159 = scmp.ne.s32.totalorder %s142, %s158
    %p160 = scmp.eq.s32.totalorder %s16, 0
    %p161 = por %p159, %p160
    %p162 = scmp.le.s32.totalorder 1, %s10
    %p163 = scmp.lt.s32.totalorder %s10, 3
    %p164 = pnand %p162, %p163
    %p165 = pneg %p164
    // Predicated region
    $region9: #{flat_bert_multitask_forward.9} parent=5 // pred_check
      _
    $region10: #{flat_bert_multitask_forward.9} parent=5 // pred_check_branch
      %167 = sbr.rel (%p164) target = $region12
    $region11: #{flat_bert_multitask_forward.9} parent=5 // pred_region
      %s168 = ssub.s32 %s10, 1
      // Predicated region
      $region13: #{flat_bert_multitask_forward.9} parent=11 // pred_check
        %p169 = pneg %p74
      $region14: #{flat_bert_multitask_forward.9} parent=11 // pred_check_branch
        %171 = sbr.rel (%p169) target = $region16
      $region15: #{flat_bert_multitask_forward.9} parent=11 // pred_region
        %p172 = scmp.lt.s32.totalorder %s20, 0
        %s173 = scalar_select %p172, %s20, 0
        %s174 = smul.addr %s173, 4
        %s175 = smul.addr %s174, 4
        %s176 = scalar_lea.vmem %s1, %s175
      $region16: #{flat_bert_multitask_forward.9} parent=11 // pred_fallthru
        _
      // Predicated region
      $region17: #{flat_bert_multitask_forward.9} parent=11 // pred_check
        %p177 = pneg %p100
      $region18: #{flat_bert_multitask_forward.9} parent=11 // pred_check_branch
        %179 = sbr.rel (%p177) target = $region20
      $region19: #{flat_bert_multitask_forward.9} parent=11 // pred_region
        %p180 = scmp.lt.s32.totalorder %s20, 0
        %s181 = scalar_select %p180, %s20, 0
        %s182 = scalar_lea.vmem %s2, %s181
      $region20: #{flat_bert_multitask_forward.9} parent=11 // pred_fallthru
        _
    $region12: #{flat_bert_multitask_forward.9} parent=5 // pred_fallthru
      _
    %p183 = scmp.lt.s32.totalorder %s10, 2
    // Predicated region
    $region21: #{flat_bert_multitask_forward.9} parent=5 // pred_check
      %p184 = pneg %p183
    $region22: #{flat_bert_multitask_forward.9} parent=5 // pred_check_branch
      %186 = sbr.rel (%p184) target = $region24
    $region23: #{flat_bert_multitask_forward.9} parent=5 // pred_region
      // Predicated region
      $region25: #{flat_bert_multitask_forward.9} parent=23 // pred_check
        %p187 = pneg %p42
      $region26: #{flat_bert_multitask_forward.9} parent=23 // pred_check_branch
        %189 = sbr.rel (%p187) target = $region28
      $region27: #{flat_bert_multitask_forward.9} parent=23 // pred_region
        %p190 = scmp.lt.s32.totalorder %s17, 1
        %s191 = scalar_select %p190, %s17, 1
        %s192 = smul.addr %s191, 4
        %s193 = scalar_lea.vmem %s0, %s192
      $region28: #{flat_bert_multitask_forward.9} parent=23 // pred_fallthru
        _
      // Predicated region
      $region29: #{flat_bert_multitask_forward.9} parent=23 // pred_check
        %p194 = pneg %p120
      $region30: #{flat_bert_multitask_forward.9} parent=23 // pred_check_branch
        %196 = sbr.rel (%p194) target = $region32
      $region31: #{flat_bert_multitask_forward.9} parent=23 // pred_region
        %p197 = scmp.lt.s32.totalorder %s17, 1
        %s198 = scalar_select %p197, %s17, 1
        %s199 = scalar_lea.vmem %s3, %s198
      $region32: #{flat_bert_multitask_forward.9} parent=23 // pred_fallthru
        _
    $region24: #{flat_bert_multitask_forward.9} parent=5 // pred_fallthru
      _
    %p200 = scmp.le.s32.totalorder 1, %s10
    %p201 = scmp.lt.s32.totalorder %s10, 3
    %p202 = pnand %p200, %p201
    %p203 = pneg %p202
    // Predicated region
    $region33: #{flat_bert_multitask_forward.9} parent=5 // pred_check
      _
    $region34: #{flat_bert_multitask_forward.9} parent=5 // pred_check_branch
      %205 = sbr.rel (%p202) target = $region36
    $region35: #{flat_bert_multitask_forward.9} parent=5 // pred_region
      %s206 = ssub.s32 %s10, 1
      %p207 = scmp.lt.s32.totalorder %s19, 1
      %s208 = scalar_select %p207, %s19, 1
      %s209 = smul.addr %s208, 4
      %s210 = scalar_lea.vmem %s0, %s209
      %p211 = pneg %p48
      %p212 = pneg %p45
      %p213 = scmp.lt.s32.totalorder %s20, 0
      %s214 = scalar_select %p213, %s20, 0
      %s215 = smul.addr %s214, 4
      %s216 = smul.addr %s215, 4
      %s217 = scalar_lea.vmem %s1, %s216
      %p218 = pneg %p74
      %p219 = pneg %p71
      %p220 = scmp.lt.s32.totalorder %s20, 0
      %s221 = scalar_select %p220, %s20, 0
      %s222 = scalar_lea.vmem %s2, %s221
      %p223 = pneg %p100
      %p224 = pneg %p97
      %p225 = scmp.lt.s32.totalorder %s19, 1
      %s226 = scalar_select %p225, %s19, 1
      %s227 = scalar_lea.vmem %s3, %s226
      %p228 = pneg %p126
      %p229 = pneg %p123
      %p230 = pneg %p154
      %p231 = pneg %p151
      %p232 = scmp.lt.s32.totalorder %s19, 1
      %s233 = scalar_select %p232, %s19, 1
      %p234 = scmp.lt.s32.totalorder %s20, 0
      %s235 = scalar_select %p234, %s20, 0
      %s236 = sadd.s32 %s235, %s233
      %s237 = smul.addr %s236, 4
      %s238 = scalar_lea.vmem %s4, %s237
      %p239 = scmp.lt.s32.totalorder %s19, 1
      %s240 = scalar_select %p239, %s19, 1
      %s241 = smul.addr %s240, 4
      %s242 = scalar_lea.vmem %s0, %s241
      %p243 = scmp.lt.s32.totalorder %s20, 0
      %s244 = scalar_select %p243, %s20, 0
      %s245 = smul.addr %s244, 4
      %s246 = smul.addr %s245, 4
      %s247 = scalar_lea.vmem %s1, %s246
      %p248 = scmp.lt.s32.totalorder %s20, 0
      %s249 = scalar_select %p248, %s20, 0
      %s250 = scalar_lea.vmem %s2, %s249
      %p251 = scmp.lt.s32.totalorder %s19, 1
      %s252 = scalar_select %p251, %s19, 1
      %s253 = scalar_lea.vmem %s3, %s252
      %p254 = scmp.lt.s32.totalorder %s19, 1
      %s255 = scalar_select %p254, %s19, 1
      %p256 = scmp.lt.s32.totalorder %s20, 0
      %s257 = scalar_select %p256, %s20, 0
      %s258 = sadd.s32 %s257, %s255
      %s259 = smul.addr %s258, 4
      %s260 = scalar_lea.vmem %s4, %s259
      %v262 = vld [vmem:[%s242] sm:$0xf]
      %v263 = vld [vmem:[%s247] sm:$0xf]
      %v264 = vld [vmem:[%s247 + $0x4] sm:$0xf]
      %v265 = vld [vmem:[%s247 + $0x8] sm:$0xf]
      %v266 = vld [vmem:[%s247 + $0xc] sm:$0xf]
      %v267 = vld [vmem:[%s250] sm:$0x1]
      %v269 = vlaneseq
      %v270 = vshrl.u32 %v269, 7
      %v271 = vsub.s32 0, %v270
      %v272 = vrot.slane %v267, %v271
      %v278 = vunpack.c.l.b16 %v263
      %v279 = vunpack.c.l.b16 %v264
      %v280 = vunpack.c.l.b16 %v265
      %v281 = vunpack.c.l.b16 %v266
      %v282 = vpack.c.b16 %v279, %v278
      %v283 = vpack.c.b16 %v281, %v280
      %vm286 = vcmask 261120
      %v288 = vsel %vm286, %v262, 0
      %290 = vmatprep.subr.bf16.mxu0 0
      %291 = vmatpush1.bf16.msra.mxu0 %v282
      %292 = vmatprep.subr.bf16.mxu0 0
      %293 = vmatpush1.bf16.msra.mxu0 %v283
      %294 = vmatprep.subr.bf16.mxu0 0
      %295 = vmatpush1.bf16.msra.mxu0 0
      %296 = vmatprep.subr.bf16.mxu0 0
      %297 = vmatpush1.bf16.msra.mxu0 0
      %298 = vmatprep.subr.bf16.mxu0 0
      %299 = vmatpush1.bf16.msra.mxu0 0
      %300 = vmatprep.subr.bf16.mxu0 0
      %301 = vmatpush1.bf16.msra.mxu0 0
      %302 = vmatprep.subr.bf16.mxu0 0
      %303 = vmatpush1.bf16.msra.mxu0 0
      %304 = vmatprep.subr.bf16.mxu0 0
      %305 = vmatpush1.bf16.msra.mxu0 0
      %306 = vmatprep.subr.bf16.mxu0 0
      %307 = vmatpush1.bf16.msra.mxu0 0
      %308 = vmatprep.subr.bf16.mxu0 0
      %309 = vmatpush1.bf16.msra.mxu0 0
      %310 = vmatprep.subr.bf16.mxu0 0
      %311 = vmatpush1.bf16.msra.mxu0 0
      %312 = vmatprep.subr.bf16.mxu0 0
      %313 = vmatpush1.bf16.msra.mxu0 0
      %314 = vmatprep.subr.bf16.mxu0 0
      %315 = vmatpush1.bf16.msra.mxu0 0
      %316 = vmatprep.subr.bf16.mxu0 0
      %317 = vmatpush1.bf16.msra.mxu0 0
      %318 = vmatprep.subr.bf16.mxu0 0
      %319 = vmatpush1.bf16.msra.mxu0 0
      %320 = vmatprep.subr.bf16.mxu0 0
      %321 = vmatpush1.bf16.msra.mxu0 0
      %322 = vmatprep.mubr.bf16.mxu0 0
      %323 = vmatmul.mubr.bf16.gmra.mrb[0].mxu0 %v288
      %v324 = vpop.f32.mrb[0].mxu0
      %v325 = vadd.f32 %v272, %v324
      %v326 = vpop.f32.mrb[0].mxu0
      %v327 = vpop.f32.mrb[0].mxu0
      %v328 = vpop.f32.mrb[0].mxu0
      %329 = vdwg.mxu0
      %v330 = vpack.c.bf16 %v325, %v325
      %v331 = vld [vmem:[%s253] sm:$0x1]
      %333 = vrot.lane.b32.xlu0 %v330, 96
      %v334 = vpop.permute.xlu0 %333
      %vm335 = vcmask 130048
      %v337 = vsel %vm335, %v330, 0
      %v340 = vsel %vm335, %v334, 0
      %342 = vmatprep.subr.bf16.mxu0 0
      %343 = vmatpush1.bf16.xpose.msra.mxu0 %v340
      %344 = vmatprep.subr.bf16.mxu0 0
      %345 = vmatpush1.bf16.xpose.msra.mxu0 0
      %346 = vmatprep.subr.bf16.mxu0 0
      %347 = vmatpush1.bf16.xpose.msra.mxu0 0
      %348 = vmatprep.subr.bf16.mxu0 0
      %349 = vmatpush1.bf16.xpose.msra.mxu0 0
      %350 = vmatprep.subr.bf16.mxu0 0
      %351 = vmatpush1.bf16.xpose.msra.mxu0 0
      %352 = vmatprep.subr.bf16.mxu0 0
      %353 = vmatpush1.bf16.xpose.msra.mxu0 0
      %354 = vmatprep.subr.bf16.mxu0 0
      %355 = vmatpush1.bf16.xpose.msra.mxu0 0
      %356 = vmatprep.subr.bf16.mxu0 0
      %357 = vmatpush1.bf16.xpose.msra.mxu0 0
      %358 = vmatprep.subr.bf16.mxu0 0
      %359 = vmatpush1.bf16.xpose.msra.mxu0 0
      %360 = vmatprep.subr.bf16.mxu0 0
      %361 = vmatpush1.bf16.xpose.msra.mxu0 0
      %362 = vmatprep.subr.bf16.mxu0 0
      %363 = vmatpush1.bf16.xpose.msra.mxu0 0
      %364 = vmatprep.subr.bf16.mxu0 0
      %365 = vmatpush1.bf16.xpose.msra.mxu0 0
      %366 = vmatprep.subr.bf16.mxu0 0
      %367 = vmatpush1.bf16.xpose.msra.mxu0 0
      %368 = vmatprep.subr.bf16.mxu0 0
      %369 = vmatpush1.bf16.xpose.msra.mxu0 0
      %370 = vmatprep.subr.bf16.mxu0 0
      %371 = vmatpush1.bf16.xpose.msra.mxu0 0
      %372 = vmatprep.subr.bf16.mxu0 0
      %373 = vmatpush1.bf16.xpose.msra.mxu0 0
      %374 = vmatprep.mubr.bf16.mxu0 0
      %375 = vmatmul.mubr.bf16.gmra.mrb[0].mxu0 %v337
      %v376 = vpop.f32.mrb[0].mxu0
      %v377 = vadd.f32 0.0, %v376
      %v378 = vpop.f32.mrb[0].mxu0
      %v379 = vpop.f32.mrb[0].mxu0
      %v380 = vpop.f32.mrb[0].mxu0
      %381 = vdwg.mxu0
      %v382 = vmul.f32 %v377, 0.25
      %v384 = vlaneseq
      %v385 = vshrl.u32 %v384, 7
      %v386 = vsub.s32 0, %v385
      %v387 = vrot.slane %v331, %v386
      %v389 = vadd.f32 %v382, %v387
      %vm390 = vcmask 64512
      %v391 = vsel %vm390, %v389, -inf
      %392 = vmax.xlane.f32.xlu0 %v391
      %v393 = vpop.xlane.xlu0 %392
      %v394 = vsub.f32 %v389, %v393
      %v395 = vmul.f32 %v394, 1.442695
      %v396 = vpow.pop %v395
      %v397 = vsel %vm390, %v396, 0.0
      %398 = vadd.xlane.f32.xlu0 %v397
      %v399 = vpop.xlane.xlu0 %398
      %v400 = vrcp.pop %v399
      %v401 = vmul.f32 %v396, %v400
      %v402 = vpack.c.bf16 %v401, %v401
      %403 = vrot.lane.b32.xlu0 %v330, 64
      %v404 = vpop.permute.xlu0 %403
      %v406 = vsel %vm390, %v402, 0
      %vm408 = vcmask 1043456
      %v410 = vsel %vm408, %v404, 0
      %412 = vmatprep.subr.bf16.mxu0 0
      %413 = vmatpush1.bf16.msra.mxu0 %v410
      %414 = vmatprep.subr.bf16.mxu0 0
      %415 = vmatpush1.bf16.msra.mxu0 0
      %416 = vmatprep.subr.bf16.mxu0 0
      %417 = vmatpush1.bf16.msra.mxu0 0
      %418 = vmatprep.subr.bf16.mxu0 0
      %419 = vmatpush1.bf16.msra.mxu0 0
      %420 = vmatprep.subr.bf16.mxu0 0
      %421 = vmatpush1.bf16.msra.mxu0 0
      %422 = vmatprep.subr.bf16.mxu0 0
      %423 = vmatpush1.bf16.msra.mxu0 0
      %424 = vmatprep.subr.bf16.mxu0 0
      %425 = vmatpush1.bf16.msra.mxu0 0
      %426 = vmatprep.subr.bf16.mxu0 0
      %427 = vmatpush1.bf16.msra.mxu0 0
      %428 = vmatprep.subr.bf16.mxu0 0
      %429 = vmatpush1.bf16.msra.mxu0 0
      %430 = vmatprep.subr.bf16.mxu0 0
      %431 = vmatpush1.bf16.msra.mxu0 0
      %432 = vmatprep.subr.bf16.mxu0 0
      %433 = vmatpush1.bf16.msra.mxu0 0
      %434 = vmatprep.subr.bf16.mxu0 0
      %435 = vmatpush1.bf16.msra.mxu0 0
      %436 = vmatprep.subr.bf16.mxu0 0
      %437 = vmatpush1.bf16.msra.mxu0 0
      %438 = vmatprep.subr.bf16.mxu0 0
      %439 = vmatpush1.bf16.msra.mxu0 0
      %440 = vmatprep.subr.bf16.mxu0 0
      %441 = vmatpush1.bf16.msra.mxu0 0
      %442 = vmatprep.subr.bf16.mxu0 0
      %443 = vmatpush1.bf16.msra.mxu0 0
      %444 = vmatprep.mubr.bf16.mxu0 0
      %445 = vmatmul.mubr.bf16.gmra.mrb[0].mxu0 %v406
      %v446 = vpop.f32.mrb[0].mxu0
      %v447 = vadd.f32 0.0, %v446
      %v448 = vpop.f32.mrb[0].mxu0
      %v449 = vpop.f32.mrb[0].mxu0
      %v450 = vpop.f32.mrb[0].mxu0
      %451 = vdwg.mxu0
      %v452 = vpack.c.bf16 %v447, %v447
      %vm453 = vcmask 125952
      %454 = vst.msk [vmem:[%s260] sm:$0xf] %vm453, %v452
      %455 = vrot.lane.b32.xlu0 %v330, 112
      %v456 = vpop.permute.xlu0 %455
      %457 = vrot.lane.b32.xlu0 %v330, 80
      %v458 = vpop.permute.xlu0 %457
      %v460 = vsel %vm335, %v456, 0
      %v463 = vsel %vm335, %v458, 0
      %465 = vmatprep.subr.bf16.mxu0 0
      %466 = vmatpush1.bf16.xpose.msra.mxu0 %v463
      %467 = vmatprep.subr.bf16.mxu0 0
      %468 = vmatpush1.bf16.xpose.msra.mxu0 0
      %469 = vmatprep.subr.bf16.mxu0 0
      %470 = vmatpush1.bf16.xpose.msra.mxu0 0
      %471 = vmatprep.subr.bf16.mxu0 0
      %472 = vmatpush1.bf16.xpose.msra.mxu0 0
      %473 = vmatprep.subr.bf16.mxu0 0
      %474 = vmatpush1.bf16.xpose.msra.mxu0 0
      %475 = vmatprep.subr.bf16.mxu0 0
      %476 = vmatpush1.bf16.xpose.msra.mxu0 0
      %477 = vmatprep.subr.bf16.mxu0 0
      %478 = vmatpush1.bf16.xpose.msra.mxu0 0
      %479 = vmatprep.subr.bf16.mxu0 0
      %480 = vmatpush1.bf16.xpose.msra.mxu0 0
      %481 = vmatprep.subr.bf16.mxu0 0
      %482 = vmatpush1.bf16.xpose.msra.mxu0 0
      %483 = vmatprep.subr.bf16.mxu0 0
      %484 = vmatpush1.bf16.xpose.msra.mxu0 0
      %485 = vmatprep.subr.bf16.mxu0 0
      %486 = vmatpush1.bf16.xpose.msra.mxu0 0
      %487 = vmatprep.subr.bf16.mxu0 0
      %488 = vmatpush1.bf16.xpose.msra.mxu0 0
      %489 = vmatprep.subr.bf16.mxu0 0
      %490 = vmatpush1.bf16.xpose.msra.mxu0 0
      %491 = vmatprep.subr.bf16.mxu0 0
      %492 = vmatpush1.bf16.xpose.msra.mxu0 0
      %493 = vmatprep.subr.bf16.mxu0 0
      %494 = vmatpush1.bf16.xpose.msra.mxu0 0
      %495 = vmatprep.subr.bf16.mxu0 0
      %496 = vmatpush1.bf16.xpose.msra.mxu0 0
      %497 = vmatprep.mubr.bf16.mxu0 0
      %498 = vmatmul.mubr.bf16.gmra.mrb[0].mxu0 %v460
      %v499 = vpop.f32.mrb[0].mxu0
      %v500 = vadd.f32 0.0, %v499
      %v501 = vpop.f32.mrb[0].mxu0
      %v502 = vpop.f32.mrb[0].mxu0
      %v503 = vpop.f32.mrb[0].mxu0
      %504 = vdwg.mxu0
      %v505 = vmul.f32 %v500, 0.25
      %v506 = vadd.f32 %v505, %v387
      %v507 = vsel %vm390, %v506, -inf
      %508 = vmax.xlane.f32.xlu0 %v507
      %v509 = vpop.xlane.xlu0 %508
      %v510 = vsub.f32 %v506, %v509
      %v511 = vmul.f32 %v510, 1.442695
      %v512 = vpow.pop %v511
      %v513 = vsel %vm390, %v512, 0.0
      %514 = vadd.xlane.f32.xlu0 %v513
      %v515 = vpop.xlane.xlu0 %514
      %v516 = vrcp.pop %v515
      %v517 = vmul.f32 %v512, %v516
      %v518 = vpack.c.bf16 %v517, %v517
      %519 = vrot.lane.b32.xlu0 %v330, 48
      %v520 = vpop.permute.xlu0 %519
      %v522 = vsel %vm390, %v518, 0
      %v525 = vsel %vm408, %v520, 0
      %527 = vmatprep.subr.bf16.mxu0 0
      %528 = vmatpush1.bf16.msra.mxu0 %v525
      %529 = vmatprep.subr.bf16.mxu0 0
      %530 = vmatpush1.bf16.msra.mxu0 0
      %531 = vmatprep.subr.bf16.mxu0 0
      %532 = vmatpush1.bf16.msra.mxu0 0
      %533 = vmatprep.subr.bf16.mxu0 0
      %534 = vmatpush1.bf16.msra.mxu0 0
      %535 = vmatprep.subr.bf16.mxu0 0
      %536 = vmatpush1.bf16.msra.mxu0 0
      %537 = vmatprep.subr.bf16.mxu0 0
      %538 = vmatpush1.bf16.msra.mxu0 0
      %539 = vmatprep.subr.bf16.mxu0 0
      %540 = vmatpush1.bf16.msra.mxu0 0
      %541 = vmatprep.subr.bf16.mxu0 0
      %542 = vmatpush1.bf16.msra.mxu0 0
      %543 = vmatprep.subr.bf16.mxu0 0
      %544 = vmatpush1.bf16.msra.mxu0 0
      %545 = vmatprep.subr.bf16.mxu0 0
      %546 = vmatpush1.bf16.msra.mxu0 0
      %547 = vmatprep.subr.bf16.mxu0 0
      %548 = vmatpush1.bf16.msra.mxu0 0
      %549 = vmatprep.subr.bf16.mxu0 0
      %550 = vmatpush1.bf16.msra.mxu0 0
      %551 = vmatprep.subr.bf16.mxu0 0
      %552 = vmatpush1.bf16.msra.mxu0 0
      %553 = vmatprep.subr.bf16.mxu0 0
      %554 = vmatpush1.bf16.msra.mxu0 0
      %555 = vmatprep.subr.bf16.mxu0 0
      %556 = vmatpush1.bf16.msra.mxu0 0
      %557 = vmatprep.subr.bf16.mxu0 0
      %558 = vmatpush1.bf16.msra.mxu0 0
      %559 = vmatprep.mubr.bf16.mxu0 0
      %560 = vmatmul.mubr.bf16.gmra.mrb[0].mxu0 %v522
      %v561 = vpop.f32.mrb[0].mxu0
      %v562 = vadd.f32 0.0, %v561
      %v563 = vpop.f32.mrb[0].mxu0
      %v564 = vpop.f32.mrb[0].mxu0
      %v565 = vpop.f32.mrb[0].mxu0
      %566 = vdwg.mxu0
      %v567 = vpack.c.bf16 %v562, %v562
      %v569 = vunpack.c.l.b16 %v567
      %v570 = vpack.c.b16 %v569, %v569
      %571 = vrot.lane.b32.xlu0 %v570, 16
      %v572 = vpop.permute.xlu0 %571
      %vm574 = vcmask 257152
      %575 = vst.msk [vmem:[%s260] sm:$0xf] %vm574, %v572
      %p576 = scmp.lt.s32.totalorder %s19, 1
      %s577 = scalar_select %p576, %s19, 1
      %p578 = scmp.lt.s32.totalorder %s20, 0
      %s579 = scalar_select %p578, %s20, 0
      %s580 = sadd.s32 %s579, %s577
      %s581 = smul.addr %s580, 4
      %s582 = scalar_lea.vmem %s4, %s581
      // Predicated region
      $region37: #{flat_bert_multitask_forward.9} parent=35 // pred_check
        %p583 = pneg %p151
      $region38: #{flat_bert_multitask_forward.9} parent=35 // pred_check_branch
        %585 = sbr.rel (%p583) target = $region40
      $region39: #{flat_bert_multitask_forward.9} parent=35 // pred_region
        _
      $region40: #{flat_bert_multitask_forward.9} parent=35 // pred_fallthru
        _
    $region36: #{flat_bert_multitask_forward.9} parent=5 // pred_fallthru
      _
    %p586 = scmp.le.s32.totalorder 2, %s10
    // Predicated region
    $region41: #{flat_bert_multitask_forward.9} parent=5 // pred_check
      %p587 = pneg %p586
    $region42: #{flat_bert_multitask_forward.9} parent=5 // pred_check_branch
      %589 = sbr.rel (%p587) target = $region44
    $region43: #{flat_bert_multitask_forward.9} parent=5 // pred_region
      %s590 = ssub.s32 %s10, 2
      // Predicated region
      $region45: #{flat_bert_multitask_forward.9} parent=43 // pred_check
        %p591 = pneg %p157
      $region46: #{flat_bert_multitask_forward.9} parent=43 // pred_check_branch
        %593 = sbr.rel (%p591) target = $region48
      $region47: #{flat_bert_multitask_forward.9} parent=43 // pred_region
        %p594 = scmp.lt.s32.totalorder %s21, 1
        %s595 = scalar_select %p594, %s21, 1
        %p596 = scmp.lt.s32.totalorder %s22, 0
        %s597 = scalar_select %p596, %s22, 0
        %s598 = sadd.s32 %s597, %s595
        %s599 = smul.addr %s598, 4
        %s600 = scalar_lea.vmem %s4, %s599
      $region48: #{flat_bert_multitask_forward.9} parent=43 // pred_fallthru
        _
    $region44: #{flat_bert_multitask_forward.9} parent=5 // pred_fallthru
      _
  $region6: #{flat_bert_multitask_forward.9} parent=0 // loop_footer
    %s14 = sadd.s32 1, %s10
  $region7: #{flat_bert_multitask_forward.9} parent=0 // loop_footer_branch
    %9 = sbr.rel target = $region3
  $region8: #{flat_bert_multitask_forward.9} parent=0 // loop_exit
    _

// kernel: flat_bert_multitask_forward.11
$region0: #{flat_bert_multitask_forward.11}
  #allocation0 [shape = 'u32[]', space=smem, size = 0x4, offset = 0x4, fixed_abs, tag = 'smem constant byte address 0x4 - core index']
  #allocation1 [shape = 'u32[144,128]{1,0:T(1,128)}', space=vmem, size = 0x12000, scoped, tag = 'internal scratch']
  #allocation2 [shape = 'f32[16,32]{1,0:T(8,128)}', space=vmem, size = 0x2000, scoped, tag = 'scratch operand']
  %s0 = inlined_call_operand.vmem [shape: bf16[16,32], index: 0, kind: input, shape index: {}]
  %s1 = inlined_call_operand.vmem [shape: bf16[32,64], index: 1, kind: input, shape index: {}]
  %s2 = inlined_call_operand.vmem [shape: f32[1,64], index: 2, kind: input, shape index: {}]
  %s3 = inlined_call_operand.vmem [shape: bf16[64,32], index: 3, kind: input, shape index: {}]
  %s4 = inlined_call_operand.vmem [shape: f32[1,32], index: 4, kind: input, shape index: {}]
  %s5 = inlined_call_operand.vmem [shape: f32[1,32], index: 5, kind: input, shape index: {}]
  %s6 = inlined_call_operand.vmem [shape: f32[1,32], index: 6, kind: input, shape index: {}]
  %s7 = inlined_call_operand.vmem [shape: bf16[16,32], index: 7, kind: output, shape index: {}]
  %s8 = sld [smem:[#allocation0]]
  $region46: #{flat_bert_multitask_forward.11} parent=0
    _
  %s10 = ssub.s32 1, %s8
  %s11 = scalar_select 0, %s10, %s8
  // Predicated region
  $region2: #{flat_bert_multitask_forward.11} parent=0 // pred_check
    _
  $region3: #{flat_bert_multitask_forward.11} parent=0 // pred_check_branch
    %13 = sbr.rel (0) target = $region5
  $region4: #{flat_bert_multitask_forward.11} parent=0 // pred_region
    _
  $region5: #{flat_bert_multitask_forward.11} parent=0 // pred_fallthru
    _
  // Predicated region
  $region6: #{flat_bert_multitask_forward.11} parent=0 // pred_check
    _
  $region7: #{flat_bert_multitask_forward.11} parent=0 // pred_check_branch
    %15 = sbr.rel (0) target = $region9
  $region8: #{flat_bert_multitask_forward.11} parent=0 // pred_region
    _
  $region9: #{flat_bert_multitask_forward.11} parent=0 // pred_fallthru
    _
  // Predicated region
  $region10: #{flat_bert_multitask_forward.11} parent=0 // pred_check
    _
  $region11: #{flat_bert_multitask_forward.11} parent=0 // pred_check_branch
    %17 = sbr.rel (0) target = $region13
  $region12: #{flat_bert_multitask_forward.11} parent=0 // pred_region
    _
  $region13: #{flat_bert_multitask_forward.11} parent=0 // pred_fallthru
    _
  // Predicated region
  $region14: #{flat_bert_multitask_forward.11} parent=0 // pred_check
    _
  $region15: #{flat_bert_multitask_forward.11} parent=0 // pred_check_branch
    %19 = sbr.rel (0) target = $region17
  $region16: #{flat_bert_multitask_forward.11} parent=0 // pred_region
    _
  $region17: #{flat_bert_multitask_forward.11} parent=0 // pred_fallthru
    _
  // Predicated region
  $region18: #{flat_bert_multitask_forward.11} parent=0 // pred_check
    _
  $region19: #{flat_bert_multitask_forward.11} parent=0 // pred_check_branch
    %21 = sbr.rel (0) target = $region21
  $region20: #{flat_bert_multitask_forward.11} parent=0 // pred_region
    _
  $region21: #{flat_bert_multitask_forward.11} parent=0 // pred_fallthru
    _
  // Predicated region
  $region22: #{flat_bert_multitask_forward.11} parent=0 // pred_check
    _
  $region23: #{flat_bert_multitask_forward.11} parent=0 // pred_check_branch
    %23 = sbr.rel (0) target = $region25
  $region24: #{flat_bert_multitask_forward.11} parent=0 // pred_region
    _
  $region25: #{flat_bert_multitask_forward.11} parent=0 // pred_fallthru
    _
  // Predicated region
  $region26: #{flat_bert_multitask_forward.11} parent=0 // pred_check
    _
  $region27: #{flat_bert_multitask_forward.11} parent=0 // pred_check_branch
    %25 = sbr.rel (0) target = $region29
  $region28: #{flat_bert_multitask_forward.11} parent=0 // pred_region
    _
  $region29: #{flat_bert_multitask_forward.11} parent=0 // pred_fallthru
    _
  %p31 = scmp.eq.s32.totalorder 0, 0
  // Predicated region
  $region30: #{flat_bert_multitask_forward.11} parent=0 // pred_check
    %p32 = pneg %p31
  $region31: #{flat_bert_multitask_forward.11} parent=0 // pred_check_branch
    %34 = sbr.rel (%p32) target = $region33
  $region32: #{flat_bert_multitask_forward.11} parent=0 // pred_region
    %vm35 = vcmask 261120
    %36 = vst.msk [vmem:[#allocation2] sm:$0xff] %vm35, 0.0
    %37 = vst.msk [vmem:[#allocation2 + $0x8] sm:$0xff] %vm35, 0.0
  $region33: #{flat_bert_multitask_forward.11} parent=0 // pred_fallthru
    _
  %v38 = vld [vmem:[%s0] sm:$0xf]
  %v39 = vld [vmem:[%s0 + $0x4] sm:$0xf]
  %v40 = vld [vmem:[%s1] sm:$0xf]
  %v41 = vld [vmem:[%s1 + $0x4] sm:$0xf]
  %v42 = vld [vmem:[%s1 + $0x8] sm:$0xf]
  %v43 = vld [vmem:[%s1 + $0xc] sm:$0xf]
  %v44 = vld [vmem:[%s2] sm:$0x1]
  %v46 = vlaneseq
  %v47 = vshrl.u32 %v46, 7
  %v48 = vsub.s32 0, %v47
  %v49 = vrot.slane %v44, %v48
  %v53 = vunpack.c.l.b16 %v38
  %v54 = vunpack.c.l.b16 %v39
  %v55 = vpack.c.b16 %v54, %v53
  %v60 = vunpack.c.l.b16 %v40
  %v61 = vunpack.c.l.b16 %v41
  %v62 = vunpack.c.l.b16 %v42
  %v63 = vunpack.c.l.b16 %v43
  %v64 = vpack.c.b16 %v61, %v60
  %v65 = vpack.c.b16 %v63, %v62
  %vm68 = vcmask 261120
  %v70 = vsel %vm68, %v55, 0
  %72 = vmatprep.subr.bf16.mxu0 0
  %73 = vmatpush1.bf16.msra.mxu0 %v64
  %74 = vmatprep.subr.bf16.mxu0 0
  %75 = vmatpush1.bf16.msra.mxu0 %v65
  %76 = vmatprep.subr.bf16.mxu0 0
  %77 = vmatpush1.bf16.msra.mxu0 0
  %78 = vmatprep.subr.bf16.mxu0 0
  %79 = vmatpush1.bf16.msra.mxu0 0
  %80 = vmatprep.subr.bf16.mxu0 0
  %81 = vmatpush1.bf16.msra.mxu0 0
  %82 = vmatprep.subr.bf16.mxu0 0
  %83 = vmatpush1.bf16.msra.mxu0 0
  %84 = vmatprep.subr.bf16.mxu0 0
  %85 = vmatpush1.bf16.msra.mxu0 0
  %86 = vmatprep.subr.bf16.mxu0 0
  %87 = vmatpush1.bf16.msra.mxu0 0
  %88 = vmatprep.subr.bf16.mxu0 0
  %89 = vmatpush1.bf16.msra.mxu0 0
  %90 = vmatprep.subr.bf16.mxu0 0
  %91 = vmatpush1.bf16.msra.mxu0 0
  %92 = vmatprep.subr.bf16.mxu0 0
  %93 = vmatpush1.bf16.msra.mxu0 0
  %94 = vmatprep.subr.bf16.mxu0 0
  %95 = vmatpush1.bf16.msra.mxu0 0
  %96 = vmatprep.subr.bf16.mxu0 0
  %97 = vmatpush1.bf16.msra.mxu0 0
  %98 = vmatprep.subr.bf16.mxu0 0
  %99 = vmatpush1.bf16.msra.mxu0 0
  %100 = vmatprep.subr.bf16.mxu0 0
  %101 = vmatpush1.bf16.msra.mxu0 0
  %102 = vmatprep.subr.bf16.mxu0 0
  %103 = vmatpush1.bf16.msra.mxu0 0
  %104 = vmatprep.mubr.bf16.mxu0 0
  %105 = vmatmul.mubr.bf16.gmra.mrb[0].mxu0 %v70
  %v106 = vpop.f32.mrb[0].mxu0
  %v107 = vadd.f32 %v49, %v106
  %v108 = vpop.f32.mrb[0].mxu0
  %v109 = vpop.f32.mrb[0].mxu0
  %v110 = vadd.f32 %v49, %v109
  %v111 = vpop.f32.mrb[0].mxu0
  %112 = vdwg.mxu0
  %v113 = vpack.c.bf16 %v110, %v107
  %v114 = vmul.bf16 %v113, %v113
  %v115 = vmul.bf16 %v113, %v114
  %v116 = vmul.bf16 %v115, 1027030327
  %v117 = vadd.bf16 %v113, %v116
  %v118 = vmul.bf16 %v117, 1061961548
  %v119 = vtanh.bf16.pop %v118
  %v120 = vadd.bf16 %v119, 1065369472
  %v121 = vmul.bf16 %v120, 1056980736
  %v122 = vmul.bf16 %v113, %v121
  %v123 = vld [vmem:[#allocation2] sm:$0xff]
  %v124 = vld [vmem:[#allocation2 + $0x8] sm:$0xff]
  %v125 = vld [vmem:[%s3] sm:$0xf]
  %v126 = vld [vmem:[%s3 + $0x4] sm:$0xf]
  %v127 = vld [vmem:[%s3 + $0x8] sm:$0xf]
  %v128 = vld [vmem:[%s3 + $0xc] sm:$0xf]
  %v129 = vld [vmem:[%s3 + $0x10] sm:$0xf]
  %v130 = vld [vmem:[%s3 + $0x14] sm:$0xf]
  %v131 = vld [vmem:[%s3 + $0x18] sm:$0xf]
  %v132 = vld [vmem:[%s3 + $0x1c] sm:$0xf]
  %v141 = vunpack.c.l.b16 %v125
  %v142 = vunpack.c.l.b16 %v126
  %v143 = vunpack.c.l.b16 %v127
  %v144 = vunpack.c.l.b16 %v128
  %v145 = vunpack.c.l.b16 %v129
  %v146 = vunpack.c.l.b16 %v130
  %v147 = vunpack.c.l.b16 %v131
  %v148 = vunpack.c.l.b16 %v132
  %v149 = vpack.c.b16 %v142, %v141
  %v150 = vpack.c.b16 %v144, %v143
  %v151 = vpack.c.b16 %v146, %v145
  %v152 = vpack.c.b16 %v148, %v147
  %vm157 = vcmask 523264
  %v159 = vsel %vm157, %v122, 0
  %161 = vmatprep.subr.bf16.mxu0 0
  %162 = vmatpush1.bf16.msra.mxu0 %v149
  %163 = vmatprep.subr.bf16.mxu0 0
  %164 = vmatpush1.bf16.msra.mxu0 %v150
  %165 = vmatprep.subr.bf16.mxu0 0
  %166 = vmatpush1.bf16.msra.mxu0 %v151
  %167 = vmatprep.subr.bf16.mxu0 0
  %168 = vmatpush1.bf16.msra.mxu0 %v152
  %169 = vmatprep.subr.bf16.mxu0 0
  %170 = vmatpush1.bf16.msra.mxu0 0
  %171 = vmatprep.subr.bf16.mxu0 0
  %172 = vmatpush1.bf16.msra.mxu0 0
  %173 = vmatprep.subr.bf16.mxu0 0
  %174 = vmatpush1.bf16.msra.mxu0 0
  %175 = vmatprep.subr.bf16.mxu0 0
  %176 = vmatpush1.bf16.msra.mxu0 0
  %177 = vmatprep.subr.bf16.mxu0 0
  %178 = vmatpush1.bf16.msra.mxu0 0
  %179 = vmatprep.subr.bf16.mxu0 0
  %180 = vmatpush1.bf16.msra.mxu0 0
  %181 = vmatprep.subr.bf16.mxu0 0
  %182 = vmatpush1.bf16.msra.mxu0 0
  %183 = vmatprep.subr.bf16.mxu0 0
  %184 = vmatpush1.bf16.msra.mxu0 0
  %185 = vmatprep.subr.bf16.mxu0 0
  %186 = vmatpush1.bf16.msra.mxu0 0
  %187 = vmatprep.subr.bf16.mxu0 0
  %188 = vmatpush1.bf16.msra.mxu0 0
  %189 = vmatprep.subr.bf16.mxu0 0
  %190 = vmatpush1.bf16.msra.mxu0 0
  %191 = vmatprep.subr.bf16.mxu0 0
  %192 = vmatpush1.bf16.msra.mxu0 0
  %193 = vmatprep.mubr.bf16.mxu0 0
  %194 = vmatmul.mubr.bf16.gmra.mrb[0].mxu0 %v159
  %v195 = vpop.f32.mrb[0].mxu0
  %v196 = vadd.f32 0.0, %v195
  %v197 = vpop.f32.mrb[0].mxu0
  %v198 = vpop.f32.mrb[0].mxu0
  %v199 = vadd.f32 0.0, %v198
  %v200 = vpop.f32.mrb[0].mxu0
  %201 = vdwg.mxu0
  %v202 = vadd.f32 %v123, %v196
  %v203 = vadd.f32 %v124, %v199
  %204 = vst.msk [vmem:[#allocation2] sm:$0xff] %vm68, %v202
  %205 = vst.msk [vmem:[#allocation2 + $0x8] sm:$0xff] %vm68, %v203
  // Predicated region
  $region34: #{flat_bert_multitask_forward.11} parent=0 // pred_check
    %p206 = pneg %p31
  $region35: #{flat_bert_multitask_forward.11} parent=0 // pred_check_branch
    %208 = sbr.rel (%p206) target = $region37
  $region36: #{flat_bert_multitask_forward.11} parent=0 // pred_region
    %v209 = vld [vmem:[#allocation2] sm:$0xff]
    %v210 = vld [vmem:[#allocation2 + $0x8] sm:$0xff]
    %v211 = vld [vmem:[%s4] sm:$0x1]
    %v213 = vlaneseq
    %v214 = vshrl.u32 %v213, 7
    %v215 = vsub.s32 0, %v214
    %v216 = vrot.slane %v211, %v215
    %v218 = vadd.f32 %v209, %v216
    %v219 = vadd.f32 %v210, %v216
    %v220 = vunpack.c.l.bf16 %v38
    %v221 = vunpack.c.l.bf16 %v39
    %v222 = vadd.f32 %v218, %v220
    %v223 = vadd.f32 %v219, %v221
    %v224 = vsel %vm68, %v222, 0.0
    %225 = vadd.xlane.f32.xlu0 %v224
    %v226 = vpop.xlane.xlu0 %225
    %v227 = vsel %vm68, %v223, 0.0
    %228 = vadd.xlane.f32.xlu0 %v227
    %v229 = vpop.xlane.xlu0 %228
    %v230 = vrcp.pop 32.0
    %v231 = vmul.f32 %v226, %v230
    %v232 = vmul.f32 %v229, %v230
    %v233 = vsub.f32 %v222, %v231
    %v234 = vsub.f32 %v223, %v232
    %v235 = vmul.f32 %v233, %v233
    %v236 = vmul.f32 %v234, %v234
    %v237 = vsel %vm68, %v235, 0.0
    %238 = vadd.xlane.f32.xlu0 %v237
    %v239 = vpop.xlane.xlu0 %238
    %v240 = vsel %vm68, %v236, 0.0
    %241 = vadd.xlane.f32.xlu0 %v240
    %v242 = vpop.xlane.xlu0 %241
    %v243 = vmul.f32 %v239, %v230
    %v244 = vmul.f32 %v242, %v230
    %v245 = vadd.f32 %v243, 1e-12
    %v246 = vadd.f32 %v244, 1e-12
    %v247 = vrsqrt.pop %v245
    %v248 = vrsqrt.pop %v246
    %v249 = vmul.f32 %v233, %v247
    %v250 = vmul.f32 %v234, %v248
    %v251 = vld [vmem:[%s5] sm:$0x1]
    %v253 = vlaneseq
    %v254 = vshrl.u32 %v253, 7
    %v255 = vsub.s32 0, %v254
    %v256 = vrot.slane %v251, %v255
    %v258 = vmul.f32 %v249, %v256
    %v259 = vmul.f32 %v250, %v256
    %v260 = vld [vmem:[%s6] sm:$0x1]
    %v262 = vlaneseq
    %v263 = vshrl.u32 %v262, 7
    %v264 = vsub.s32 0, %v263
    %v265 = vrot.slane %v260, %v264
    %v267 = vadd.f32 %v258, %v265
    %v268 = vadd.f32 %v259, %v265
    %v269 = vpack.c.bf16 %v268, %v267
    %v271 = vunpack.c.l.b16 %v269
    %v272 = vunpack.c.h.b16 %v269
    %v273 = vpack.c.b16 %v271, %v271
    %v274 = vpack.c.b16 %v272, %v272
    %vm277 = vcmask 257024
    %278 = vst.msk [vmem:[%s7] sm:$0xf] %vm277, %v273
    %279 = vst.msk [vmem:[%s7 + $0x4] sm:$0xf] %vm277, %v274
  $region37: #{flat_bert_multitask_forward.11} parent=0 // pred_fallthru
    _
  // Predicated region
  $region38: #{flat_bert_multitask_forward.11} parent=0 // pred_check
    _
  $region39: #{flat_bert_multitask_forward.11} parent=0 // pred_check_branch
    %281 = sbr.rel (0) target = $region41
  $region40: #{flat_bert_multitask_forward.11} parent=0 // pred_region
    _
  $region41: #{flat_bert_multitask_forward.11} parent=0 // pred_fallthru
    _
  // Predicated region
  $region42: #{flat_bert_multitask_forward.11} parent=0 // pred_check
    _
  $region43: #{flat_bert_multitask_forward.11} parent=0 // pred_check_branch
    %283 = sbr.rel (0) target = $region45
  $region44: #{flat_bert_multitask_forward.11} parent=0 // pred_region
    _
  $region45: #{flat_bert_multitask_forward.11} parent=0 // pred_fallthru
    _

// kernel: flat_bert_multitask_forward.15
$region0: #{flat_bert_multitask_forward.15}
  #allocation0 [shape = 'u32[]', space=smem, size = 0x4, offset = 0x4, fixed_abs, tag = 'smem constant byte address 0x4 - core index']
  #allocation1 [shape = 'u32[144,128]{1,0:T(1,128)}', space=vmem, size = 0x12000, scoped, tag = 'internal scratch']
  %s0 = inlined_call_operand.vmem [shape: bf16[2,32], index: 0, kind: input, shape index: {}]
  %s1 = inlined_call_operand.vmem [shape: bf16[32,32], index: 1, kind: input, shape index: {}]
  %s2 = inlined_call_operand.vmem [shape: f32[1,32], index: 2, kind: input, shape index: {}]
  %s3 = inlined_call_operand.vmem [shape: bf16[32,3], index: 3, kind: input, shape index: {}]
  %s4 = inlined_call_operand.vmem [shape: f32[1,3], index: 4, kind: input, shape index: {}]
  %s5 = inlined_call_operand.hbm [shape: f32[2,3], index: 5, kind: output, shape index: {}]
  %s6 = sld [smem:[#allocation0]]
  $region30: #{flat_bert_multitask_forward.15} parent=0
    _
  %s8 = ssub.s32 1, %s6
  %s9 = scalar_select 0, %s8, %s6
  $region1: #{flat_bert_multitask_forward.15} parent=0
    #allocation2 [shape = 'u8[1024]{0}', space=vmem, size = 0x400, scoped, tag = 'output window, operand 0, single buffered']
    #allocation3 [shape = 's32[1]{0}', space=sflag, size = 0x4, scoped, tag = 'scoped memory for flat_bert_multitask_forward.15']
    %10 = vsyncpa [#allocation3], 0
    // Predicated region
    $region2: #{flat_bert_multitask_forward.15} parent=1 // pred_check
      _
    $region3: #{flat_bert_multitask_forward.15} parent=1 // pred_check_branch
      %12 = sbr.rel (0) target = $region5
    $region4: #{flat_bert_multitask_forward.15} parent=1 // pred_region
      _
    $region5: #{flat_bert_multitask_forward.15} parent=1 // pred_fallthru
      _
    // Predicated region
    $region6: #{flat_bert_multitask_forward.15} parent=1 // pred_check
      _
    $region7: #{flat_bert_multitask_forward.15} parent=1 // pred_check_branch
      %14 = sbr.rel (0) target = $region9
    $region8: #{flat_bert_multitask_forward.15} parent=1 // pred_region
      _
    $region9: #{flat_bert_multitask_forward.15} parent=1 // pred_fallthru
      _
    // Predicated region
    $region10: #{flat_bert_multitask_forward.15} parent=1 // pred_check
      _
    $region11: #{flat_bert_multitask_forward.15} parent=1 // pred_check_branch
      %16 = sbr.rel (0) target = $region13
    $region12: #{flat_bert_multitask_forward.15} parent=1 // pred_region
      _
    $region13: #{flat_bert_multitask_forward.15} parent=1 // pred_fallthru
      _
    // Predicated region
    $region14: #{flat_bert_multitask_forward.15} parent=1 // pred_check
      _
    $region15: #{flat_bert_multitask_forward.15} parent=1 // pred_check_branch
      %18 = sbr.rel (0) target = $region17
    $region16: #{flat_bert_multitask_forward.15} parent=1 // pred_region
      _
    $region17: #{flat_bert_multitask_forward.15} parent=1 // pred_fallthru
      _
    // Predicated region
    $region18: #{flat_bert_multitask_forward.15} parent=1 // pred_check
      _
    $region19: #{flat_bert_multitask_forward.15} parent=1 // pred_check_branch
      %20 = sbr.rel (0) target = $region21
    $region20: #{flat_bert_multitask_forward.15} parent=1 // pred_region
      _
    $region21: #{flat_bert_multitask_forward.15} parent=1 // pred_fallthru
      _
    %v22 = vld [vmem:[%s0] sm:$0x1]
    %v23 = vld [vmem:[%s1] sm:$0xf]
    %v24 = vld [vmem:[%s1 + $0x4] sm:$0xf]
    %v25 = vld [vmem:[%s1 + $0x8] sm:$0xf]
    %v26 = vld [vmem:[%s1 + $0xc] sm:$0xf]
    %v27 = vld [vmem:[%s2] sm:$0x1]
    %v29 = vlaneseq
    %v30 = vshrl.u32 %v29, 7
    %v31 = vsub.s32 0, %v30
    %v32 = vrot.slane %v27, %v31
    %v38 = vunpack.c.l.b16 %v23
    %v39 = vunpack.c.l.b16 %v24
    %v40 = vunpack.c.l.b16 %v25
    %v41 = vunpack.c.l.b16 %v26
    %v42 = vpack.c.b16 %v39, %v38
    %v43 = vpack.c.b16 %v41, %v40
    %vm46 = vcmask 261120
    %v48 = vsel %vm46, %v22, 0
    %50 = vmatprep.subr.bf16.mxu0 0
    %51 = vmatpush1.bf16.msra.mxu0 %v42
    %52 = vmatprep.subr.bf16.mxu0 0
    %53 = vmatpush1.bf16.msra.mxu0 %v43
    %54 = vmatprep.subr.bf16.mxu0 0
    %55 = vmatpush1.bf16.msra.mxu0 0
    %56 = vmatprep.subr.bf16.mxu0 0
    %57 = vmatpush1.bf16.msra.mxu0 0
    %58 = vmatprep.subr.bf16.mxu0 0
    %59 = vmatpush1.bf16.msra.mxu0 0
    %60 = vmatprep.subr.bf16.mxu0 0
    %61 = vmatpush1.bf16.msra.mxu0 0
    %62 = vmatprep.subr.bf16.mxu0 0
    %63 = vmatpush1.bf16.msra.mxu0 0
    %64 = vmatprep.subr.bf16.mxu0 0
    %65 = vmatpush1.bf16.msra.mxu0 0
    %66 = vmatprep.subr.bf16.mxu0 0
    %67 = vmatpush1.bf16.msra.mxu0 0
    %68 = vmatprep.subr.bf16.mxu0 0
    %69 = vmatpush1.bf16.msra.mxu0 0
    %70 = vmatprep.subr.bf16.mxu0 0
    %71 = vmatpush1.bf16.msra.mxu0 0
    %72 = vmatprep.subr.bf16.mxu0 0
    %73 = vmatpush1.bf16.msra.mxu0 0
    %74 = vmatprep.subr.bf16.mxu0 0
    %75 = vmatpush1.bf16.msra.mxu0 0
    %76 = vmatprep.subr.bf16.mxu0 0
    %77 = vmatpush1.bf16.msra.mxu0 0
    %78 = vmatprep.subr.bf16.mxu0 0
    %79 = vmatpush1.bf16.msra.mxu0 0
    %80 = vmatprep.subr.bf16.mxu0 0
    %81 = vmatpush1.bf16.msra.mxu0 0
    %82 = vmatprep.mubr.bf16.mxu0 0
    %83 = vmatmul.mubr.bf16.gmra.mrb[0].mxu0 %v48
    %v84 = vpop.f32.mrb[0].mxu0
    %v85 = vadd.f32 %v32, %v84
    %v86 = vpop.f32.mrb[0].mxu0
    %v87 = vpop.f32.mrb[0].mxu0
    %v88 = vpop.f32.mrb[0].mxu0
    %89 = vdwg.mxu0
    %v90 = vtanh.pop %v85
    %v91 = vpack.c.bf16 %v90, %v90
    %v92 = vld [vmem:[%s3] sm:$0xf]
    %v93 = vld [vmem:[%s3 + $0x4] sm:$0xf]
    %v94 = vld [vmem:[%s3 + $0x8] sm:$0xf]
    %v95 = vld [vmem:[%s3 + $0xc] sm:$0xf]
    %v96 = vld [vmem:[%s4] sm:$0x1]
    %v98 = vlaneseq
    %v99 = vshrl.u32 %v98, 7
    %v100 = vsub.s32 0, %v99
    %v101 = vrot.slane %v96, %v100
    %v107 = vunpack.c.l.b16 %v92
    %v108 = vunpack.c.l.b16 %v93
    %v109 = vunpack.c.l.b16 %v94
    %v110 = vunpack.c.l.b16 %v95
    %v111 = vpack.c.b16 %v108, %v107
    %v112 = vpack.c.b16 %v110, %v109
    %v116 = vsel %vm46, %v91, 0
    %118 = vmatprep.subr.bf16.mxu0 0
    %119 = vmatpush1.bf16.msra.mxu0 %v111
    %120 = vmatprep.subr.bf16.mxu0 0
    %121 = vmatpush1.bf16.msra.mxu0 %v112
    %122 = vmatprep.subr.bf16.mxu0 0
    %123 = vmatpush1.bf16.msra.mxu0 0
    %124 = vmatprep.subr.bf16.mxu0 0
    %125 = vmatpush1.bf16.msra.mxu0 0
    %126 = vmatprep.subr.bf16.mxu0 0
    %127 = vmatpush1.bf16.msra.mxu0 0
    %128 = vmatprep.subr.bf16.mxu0 0
    %129 = vmatpush1.bf16.msra.mxu0 0
    %130 = vmatprep.subr.bf16.mxu0 0
    %131 = vmatpush1.bf16.msra.mxu0 0
    %132 = vmatprep.subr.bf16.mxu0 0
    %133 = vmatpush1.bf16.msra.mxu0 0
    %134 = vmatprep.subr.bf16.mxu0 0
    %135 = vmatpush1.bf16.msra.mxu0 0
    %136 = vmatprep.subr.bf16.mxu0 0
    %137 = vmatpush1.bf16.msra.mxu0 0
    %138 = vmatprep.subr.bf16.mxu0 0
    %139 = vmatpush1.bf16.msra.mxu0 0
    %140 = vmatprep.subr.bf16.mxu0 0
    %141 = vmatpush1.bf16.msra.mxu0 0
    %142 = vmatprep.subr.bf16.mxu0 0
    %143 = vmatpush1.bf16.msra.mxu0 0
    %144 = vmatprep.subr.bf16.mxu0 0
    %145 = vmatpush1.bf16.msra.mxu0 0
    %146 = vmatprep.subr.bf16.mxu0 0
    %147 = vmatpush1.bf16.msra.mxu0 0
    %148 = vmatprep.subr.bf16.mxu0 0
    %149 = vmatpush1.bf16.msra.mxu0 0
    %150 = vmatprep.mubr.bf16.mxu0 0
    %151 = vmatmul.mubr.bf16.gmra.mrb[0].mxu0 %v116
    %v152 = vpop.f32.mrb[0].mxu0
    %v153 = vadd.f32 %v101, %v152
    %v154 = vpop.f32.mrb[0].mxu0
    %v155 = vpop.f32.mrb[0].mxu0
    %v156 = vpop.f32.mrb[0].mxu0
    %157 = vdwg.mxu0
    %v158 = vxor.u32 %v153, 2147483648
    %v159 = vmul.f32 %v158, 1.442695
    %v160 = vpow.pop %v159
    %v161 = vadd.f32 %v160, 1.0
    %v162 = vrcp.pop %v161
    %v163 = vmul.f32 1.0, %v162
    %vm164 = vcmask 17408
    %165 = vst.msk [vmem:[#allocation2] sm:$0x3] %vm164, %v163
    // Predicated region
    $region22: #{flat_bert_multitask_forward.15} parent=1 // pred_check
      _
    $region23: #{flat_bert_multitask_forward.15} parent=1 // pred_check_branch
      %167 = sbr.rel (0) target = $region25
    $region24: #{flat_bert_multitask_forward.15} parent=1 // pred_region
      %s169 = ssub.s32 32, 32
      %170 = vsyncadd [#allocation3], %s169
      %s172 = sshll.u32 [#allocation2], 4
      %s173 = int_to_ptr.vmem [resolvable:$true] %s172
      %175 = dma.vmem_to_hbm [thread:$0]  %s173, 32, %s5, [#allocation3]
    $region25: #{flat_bert_multitask_forward.15} parent=1 // pred_fallthru
      _
    // Predicated region
    $region26: #{flat_bert_multitask_forward.15} parent=1 // pred_check
      _
    $region27: #{flat_bert_multitask_forward.15} parent=1 // pred_check_branch
      %177 = sbr.rel (0) target = $region29
    $region28: #{flat_bert_multitask_forward.15} parent=1 // pred_region
      %178 = dma.done [#allocation3], 32
    $region29: #{flat_bert_multitask_forward.15} parent=1 // pred_fallthru
      _
    %179 = vsyncpa [#allocation3], 1

// kernel: flat_bert_multitask_forward.14
$region0: #{flat_bert_multitask_forward.14}
  #allocation0 [shape = 'u32[]', space=smem, size = 0x4, offset = 0x4, fixed_abs, tag = 'smem constant byte address 0x4 - core index']
  #allocation1 [shape = 'u32[144,128]{1,0:T(1,128)}', space=vmem, size = 0x12000, scoped, tag = 'internal scratch']
  #allocation2 [shape = 'f32[16,32]{1,0:T(8,128)}', space=vmem, size = 0x2000, scoped, tag = 'scratch operand']
  #allocation3 [shape = 'f32[1,1]{1,0:T(1,128)S(1)}', space=vmem, size = 0x200, scoped, tag = 'scoped memory for flat_bert_multitask_forward.14']
  %s0 = inlined_call_operand.vmem [shape: bf16[16,32], index: 0, kind: input, shape index: {}]
  %s1 = inlined_call_operand.vmem [shape: bf16[32,64], index: 1, kind: input, shape index: {}]
  %s2 = inlined_call_operand.vmem [shape: f32[1,64], index: 2, kind: input, shape index: {}]
  %s3 = inlined_call_operand.vmem [shape: bf16[64,32], index: 3, kind: input, shape index: {}]
  %s4 = inlined_call_operand.vmem [shape: f32[1,32], index: 4, kind: input, shape index: {}]
  %s5 = inlined_call_operand.vmem [shape: f32[1,32], index: 5, kind: input, shape index: {}]
  %s6 = inlined_call_operand.vmem [shape: f32[1,32], index: 6, kind: input, shape index: {}]
  %s7 = inlined_call_operand.vmem [shape: f32[1,32], index: 7, kind: input, shape index: {}]
  %s8 = inlined_call_operand.<no memory space> [shape: f32[1,1], index: 8, kind: input, shape index: {}]
  %s9 = inlined_call_operand.vmem [shape: bf16[16,32], index: 9, kind: output, shape index: {0}]
  %s10 = inlined_call_operand.vmem [shape: f32[16,1], index: 10, kind: output, shape index: {1}]
  %11 = xla_tuple %s9, %s10
  %s12 = sld [smem:[#allocation0]]
  $region62: #{flat_bert_multitask_forward.14} parent=0
    _
  %s14 = ssub.s32 1, %s12
  %s15 = scalar_select 0, %s14, %s12
  %v16 = vstv %s8
  %17 = vst [vmem:[#allocation3] sm:$0x1] %v16
  // Predicated region
  $region2: #{flat_bert_multitask_forward.14} parent=0 // pred_check
    _
  $region3: #{flat_bert_multitask_forward.14} parent=0 // pred_check_branch
    %19 = sbr.rel (0) target = $region5
  $region4: #{flat_bert_multitask_forward.14} parent=0 // pred_region
    _
  $region5: #{flat_bert_multitask_forward.14} parent=0 // pred_fallthru
    _
  // Predicated region
  $region6: #{flat_bert_multitask_forward.14} parent=0 // pred_check
    _
  $region7: #{flat_bert_multitask_forward.14} parent=0 // pred_check_branch
    %21 = sbr.rel (0) target = $region9
  $region8: #{flat_bert_multitask_forward.14} parent=0 // pred_region
    _
  $region9: #{flat_bert_multitask_forward.14} parent=0 // pred_fallthru
    _
  // Predicated region
  $region10: #{flat_bert_multitask_forward.14} parent=0 // pred_check
    _
  $region11: #{flat_bert_multitask_forward.14} parent=0 // pred_check_branch
    %23 = sbr.rel (0) target = $region13
  $region12: #{flat_bert_multitask_forward.14} parent=0 // pred_region
    _
  $region13: #{flat_bert_multitask_forward.14} parent=0 // pred_fallthru
    _
  // Predicated region
  $region14: #{flat_bert_multitask_forward.14} parent=0 // pred_check
    _
  $region15: #{flat_bert_multitask_forward.14} parent=0 // pred_check_branch
    %25 = sbr.rel (0) target = $region17
  $region16: #{flat_bert_multitask_forward.14} parent=0 // pred_region
    _
  $region17: #{flat_bert_multitask_forward.14} parent=0 // pred_fallthru
    _
  // Predicated region
  $region18: #{flat_bert_multitask_forward.14} parent=0 // pred_check
    _
  $region19: #{flat_bert_multitask_forward.14} parent=0 // pred_check_branch
    %27 = sbr.rel (0) target = $region21
  $region20: #{flat_bert_multitask_forward.14} parent=0 // pred_region
    _
  $region21: #{flat_bert_multitask_forward.14} parent=0 // pred_fallthru
    _
  // Predicated region
  $region22: #{flat_bert_multitask_forward.14} parent=0 // pred_check
    _
  $region23: #{flat_bert_multitask_forward.14} parent=0 // pred_check_branch
    %29 = sbr.rel (0) target = $region25
  $region24: #{flat_bert_multitask_forward.14} parent=0 // pred_region
    _
  $region25: #{flat_bert_multitask_forward.14} parent=0 // pred_fallthru
    _
  // Predicated region
  $region26: #{flat_bert_multitask_forward.14} parent=0 // pred_check
    _
  $region27: #{flat_bert_multitask_forward.14} parent=0 // pred_check_branch
    %31 = sbr.rel (0) target = $region29
  $region28: #{flat_bert_multitask_forward.14} parent=0 // pred_region
    _
  $region29: #{flat_bert_multitask_forward.14} parent=0 // pred_fallthru
    _
  // Predicated region
  $region30: #{flat_bert_multitask_forward.14} parent=0 // pred_check
    _
  $region31: #{flat_bert_multitask_forward.14} parent=0 // pred_check_branch
    %33 = sbr.rel (0) target = $region33
  $region32: #{flat_bert_multitask_forward.14} parent=0 // pred_region
    _
  $region33: #{flat_bert_multitask_forward.14} parent=0 // pred_fallthru
    _
  // Predicated region
  $region34: #{flat_bert_multitask_forward.14} parent=0 // pred_check
    _
  $region35: #{flat_bert_multitask_forward.14} parent=0 // pred_check_branch
    %35 = sbr.rel (0) target = $region37
  $region36: #{flat_bert_multitask_forward.14} parent=0 // pred_region
    _
  $region37: #{flat_bert_multitask_forward.14} parent=0 // pred_fallthru
    _
  %p41 = scmp.eq.s32.totalorder 0, 0
  // Predicated region
  $region38: #{flat_bert_multitask_forward.14} parent=0 // pred_check
    %p42 = pneg %p41
  $region39: #{flat_bert_multitask_forward.14} parent=0 // pred_check_branch
    %44 = sbr.rel (%p42) target = $region41
  $region40: #{flat_bert_multitask_forward.14} parent=0 // pred_region
    %vm45 = vcmask 261120
    %46 = vst.msk [vmem:[#allocation2] sm:$0xff] %vm45, 0.0
    %47 = vst.msk [vmem:[#allocation2 + $0x8] sm:$0xff] %vm45, 0.0
  $region41: #{flat_bert_multitask_forward.14} parent=0 // pred_fallthru
    _
  %v48 = vld [vmem:[%s0] sm:$0xf]
  %v49 = vld [vmem:[%s0 + $0x4] sm:$0xf]
  %v50 = vld [vmem:[%s1] sm:$0xf]
  %v51 = vld [vmem:[%s1 + $0x4] sm:$0xf]
  %v52 = vld [vmem:[%s1 + $0x8] sm:$0xf]
  %v53 = vld [vmem:[%s1 + $0xc] sm:$0xf]
  %v54 = vld [vmem:[%s2] sm:$0x1]
  %v56 = vlaneseq
  %v57 = vshrl.u32 %v56, 7
  %v58 = vsub.s32 0, %v57
  %v59 = vrot.slane %v54, %v58
  %v63 = vunpack.c.l.b16 %v48
  %v64 = vunpack.c.l.b16 %v49
  %v65 = vpack.c.b16 %v64, %v63
  %v70 = vunpack.c.l.b16 %v50
  %v71 = vunpack.c.l.b16 %v51
  %v72 = vunpack.c.l.b16 %v52
  %v73 = vunpack.c.l.b16 %v53
  %v74 = vpack.c.b16 %v71, %v70
  %v75 = vpack.c.b16 %v73, %v72
  %vm78 = vcmask 261120
  %v80 = vsel %vm78, %v65, 0
  %82 = vmatprep.subr.bf16.mxu0 0
  %83 = vmatpush1.bf16.msra.mxu0 %v74
  %84 = vmatprep.subr.bf16.mxu0 0
  %85 = vmatpush1.bf16.msra.mxu0 %v75
  %86 = vmatprep.subr.bf16.mxu0 0
  %87 = vmatpush1.bf16.msra.mxu0 0
  %88 = vmatprep.subr.bf16.mxu0 0
  %89 = vmatpush1.bf16.msra.mxu0 0
  %90 = vmatprep.subr.bf16.mxu0 0
  %91 = vmatpush1.bf16.msra.mxu0 0
  %92 = vmatprep.subr.bf16.mxu0 0
  %93 = vmatpush1.bf16.msra.mxu0 0
  %94 = vmatprep.subr.bf16.mxu0 0
  %95 = vmatpush1.bf16.msra.mxu0 0
  %96 = vmatprep.subr.bf16.mxu0 0
  %97 = vmatpush1.bf16.msra.mxu0 0
  %98 = vmatprep.subr.bf16.mxu0 0
  %99 = vmatpush1.bf16.msra.mxu0 0
  %100 = vmatprep.subr.bf16.mxu0 0
  %101 = vmatpush1.bf16.msra.mxu0 0
  %102 = vmatprep.subr.bf16.mxu0 0
  %103 = vmatpush1.bf16.msra.mxu0 0
  %104 = vmatprep.subr.bf16.mxu0 0
  %105 = vmatpush1.bf16.msra.mxu0 0
  %106 = vmatprep.subr.bf16.mxu0 0
  %107 = vmatpush1.bf16.msra.mxu0 0
  %108 = vmatprep.subr.bf16.mxu0 0
  %109 = vmatpush1.bf16.msra.mxu0 0
  %110 = vmatprep.subr.bf16.mxu0 0
  %111 = vmatpush1.bf16.msra.mxu0 0
  %112 = vmatprep.subr.bf16.mxu0 0
  %113 = vmatpush1.bf16.msra.mxu0 0
  %114 = vmatprep.mubr.bf16.mxu0 0
  %115 = vmatmul.mubr.bf16.gmra.mrb[0].mxu0 %v80
  %v116 = vpop.f32.mrb[0].mxu0
  %v117 = vadd.f32 %v59, %v116
  %v118 = vpop.f32.mrb[0].mxu0
  %v119 = vpop.f32.mrb[0].mxu0
  %v120 = vadd.f32 %v59, %v119
  %v121 = vpop.f32.mrb[0].mxu0
  %122 = vdwg.mxu0
  %v123 = vpack.c.bf16 %v120, %v117
  %v124 = vmul.bf16 %v123, %v123
  %v125 = vmul.bf16 %v123, %v124
  %v126 = vmul.bf16 %v125, 1027030327
  %v127 = vadd.bf16 %v123, %v126
  %v128 = vmul.bf16 %v127, 1061961548
  %v129 = vtanh.bf16.pop %v128
  %v130 = vadd.bf16 %v129, 1065369472
  %v131 = vmul.bf16 %v130, 1056980736
  %v132 = vmul.bf16 %v123, %v131
  %v133 = vld [vmem:[#allocation2] sm:$0xff]
  %v134 = vld [vmem:[#allocation2 + $0x8] sm:$0xff]
  %v135 = vld [vmem:[%s3] sm:$0xf]
  %v136 = vld [vmem:[%s3 + $0x4] sm:$0xf]
  %v137 = vld [vmem:[%s3 + $0x8] sm:$0xf]
  %v138 = vld [vmem:[%s3 + $0xc] sm:$0xf]
  %v139 = vld [vmem:[%s3 + $0x10] sm:$0xf]
  %v140 = vld [vmem:[%s3 + $0x14] sm:$0xf]
  %v141 = vld [vmem:[%s3 + $0x18] sm:$0xf]
  %v142 = vld [vmem:[%s3 + $0x1c] sm:$0xf]
  %v151 = vunpack.c.l.b16 %v135
  %v152 = vunpack.c.l.b16 %v136
  %v153 = vunpack.c.l.b16 %v137
  %v154 = vunpack.c.l.b16 %v138
  %v155 = vunpack.c.l.b16 %v139
  %v156 = vunpack.c.l.b16 %v140
  %v157 = vunpack.c.l.b16 %v141
  %v158 = vunpack.c.l.b16 %v142
  %v159 = vpack.c.b16 %v152, %v151
  %v160 = vpack.c.b16 %v154, %v153
  %v161 = vpack.c.b16 %v156, %v155
  %v162 = vpack.c.b16 %v158, %v157
  %vm167 = vcmask 523264
  %v169 = vsel %vm167, %v132, 0
  %171 = vmatprep.subr.bf16.mxu0 0
  %172 = vmatpush1.bf16.msra.mxu0 %v159
  %173 = vmatprep.subr.bf16.mxu0 0
  %174 = vmatpush1.bf16.msra.mxu0 %v160
  %175 = vmatprep.subr.bf16.mxu0 0
  %176 = vmatpush1.bf16.msra.mxu0 %v161
  %177 = vmatprep.subr.bf16.mxu0 0
  %178 = vmatpush1.bf16.msra.mxu0 %v162
  %179 = vmatprep.subr.bf16.mxu0 0
  %180 = vmatpush1.bf16.msra.mxu0 0
  %181 = vmatprep.subr.bf16.mxu0 0
  %182 = vmatpush1.bf16.msra.mxu0 0
  %183 = vmatprep.subr.bf16.mxu0 0
  %184 = vmatpush1.bf16.msra.mxu0 0
  %185 = vmatprep.subr.bf16.mxu0 0
  %186 = vmatpush1.bf16.msra.mxu0 0
  %187 = vmatprep.subr.bf16.mxu0 0
  %188 = vmatpush1.bf16.msra.mxu0 0
  %189 = vmatprep.subr.bf16.mxu0 0
  %190 = vmatpush1.bf16.msra.mxu0 0
  %191 = vmatprep.subr.bf16.mxu0 0
  %192 = vmatpush1.bf16.msra.mxu0 0
  %193 = vmatprep.subr.bf16.mxu0 0
  %194 = vmatpush1.bf16.msra.mxu0 0
  %195 = vmatprep.subr.bf16.mxu0 0
  %196 = vmatpush1.bf16.msra.mxu0 0
  %197 = vmatprep.subr.bf16.mxu0 0
  %198 = vmatpush1.bf16.msra.mxu0 0
  %199 = vmatprep.subr.bf16.mxu0 0
  %200 = vmatpush1.bf16.msra.mxu0 0
  %201 = vmatprep.subr.bf16.mxu0 0
  %202 = vmatpush1.bf16.msra.mxu0 0
  %203 = vmatprep.mubr.bf16.mxu0 0
  %204 = vmatmul.mubr.bf16.gmra.mrb[0].mxu0 %v169
  %v205 = vpop.f32.mrb[0].mxu0
  %v206 = vadd.f32 0.0, %v205
  %v207 = vpop.f32.mrb[0].mxu0
  %v208 = vpop.f32.mrb[0].mxu0
  %v209 = vadd.f32 0.0, %v208
  %v210 = vpop.f32.mrb[0].mxu0
  %211 = vdwg.mxu0
  %v212 = vadd.f32 %v133, %v206
  %v213 = vadd.f32 %v134, %v209
  %214 = vst.msk [vmem:[#allocation2] sm:$0xff] %vm78, %v212
  %215 = vst.msk [vmem:[#allocation2 + $0x8] sm:$0xff] %vm78, %v213
  // Predicated region
  $region42: #{flat_bert_multitask_forward.14} parent=0 // pred_check
    %p216 = pneg %p41
  $region43: #{flat_bert_multitask_forward.14} parent=0 // pred_check_branch
    %218 = sbr.rel (%p216) target = $region45
  $region44: #{flat_bert_multitask_forward.14} parent=0 // pred_region
    %v219 = vld [vmem:[#allocation2] sm:$0xff]
    %v220 = vld [vmem:[#allocation2 + $0x8] sm:$0xff]
    %v221 = vld [vmem:[%s4] sm:$0x1]
    %v223 = vlaneseq
    %v224 = vshrl.u32 %v223, 7
    %v225 = vsub.s32 0, %v224
    %v226 = vrot.slane %v221, %v225
    %v228 = vadd.f32 %v219, %v226
    %v229 = vadd.f32 %v220, %v226
    %v230 = vunpack.c.l.bf16 %v48
    %v231 = vunpack.c.l.bf16 %v49
    %v232 = vadd.f32 %v228, %v230
    %v233 = vadd.f32 %v229, %v231
    %v234 = vsel %vm78, %v232, 0.0
    %235 = vadd.xlane.f32.xlu0 %v234
    %v236 = vpop.xlane.xlu0 %235
    %v237 = vsel %vm78, %v233, 0.0
    %238 = vadd.xlane.f32.xlu0 %v237
    %v239 = vpop.xlane.xlu0 %238
    %v240 = vrcp.pop 32.0
    %v241 = vmul.f32 %v236, %v240
    %v242 = vmul.f32 %v239, %v240
    %v243 = vsub.f32 %v232, %v241
    %v244 = vsub.f32 %v233, %v242
    %v245 = vmul.f32 %v243, %v243
    %v246 = vmul.f32 %v244, %v244
    %v247 = vsel %vm78, %v245, 0.0
    %248 = vadd.xlane.f32.xlu0 %v247
    %v249 = vpop.xlane.xlu0 %248
    %v250 = vsel %vm78, %v246, 0.0
    %251 = vadd.xlane.f32.xlu0 %v250
    %v252 = vpop.xlane.xlu0 %251
    %v253 = vmul.f32 %v249, %v240
    %v254 = vmul.f32 %v252, %v240
    %v255 = vadd.f32 %v253, 1e-12
    %v256 = vadd.f32 %v254, 1e-12
    %v257 = vrsqrt.pop %v255
    %v258 = vrsqrt.pop %v256
    %v259 = vmul.f32 %v243, %v257
    %v260 = vmul.f32 %v244, %v258
    %v261 = vld [vmem:[%s5] sm:$0x1]
    %v263 = vlaneseq
    %v264 = vshrl.u32 %v263, 7
    %v265 = vsub.s32 0, %v264
    %v266 = vrot.slane %v261, %v265
    %v268 = vmul.f32 %v259, %v266
    %v269 = vmul.f32 %v260, %v266
    %v270 = vld [vmem:[%s6] sm:$0x1]
    %v272 = vlaneseq
    %v273 = vshrl.u32 %v272, 7
    %v274 = vsub.s32 0, %v273
    %v275 = vrot.slane %v270, %v274
    %v277 = vadd.f32 %v268, %v275
    %v278 = vadd.f32 %v269, %v275
    %v279 = vpack.c.bf16 %v278, %v277
    %v281 = vunpack.c.l.b16 %v279
    %v282 = vunpack.c.h.b16 %v279
    %v283 = vpack.c.b16 %v281, %v281
    %v284 = vpack.c.b16 %v282, %v282
    %vm287 = vcmask 257024
    %288 = vst.msk [vmem:[%s9] sm:$0xf] %vm287, %v283
    %289 = vst.msk [vmem:[%s9 + $0x4] sm:$0xf] %vm287, %v284
    %v290 = vld [vmem:[%s7] sm:$0x1]
    %v292 = vlaneseq
    %v293 = vshrl.u32 %v292, 7
    %v294 = vsub.s32 0, %v293
    %v295 = vrot.slane %v290, %v294
    %v297 = vmul.f32 %v277, %v295
    %v298 = vmul.f32 %v278, %v295
    %v299 = vsel %vm78, %v297, 0.0
    %300 = vadd.xlane.f32.xlu0 %v299
    %v301 = vpop.xlane.xlu0 %300
    %v302 = vsel %vm78, %v298, 0.0
    %303 = vadd.xlane.f32.xlu0 %v302
    %v304 = vpop.xlane.xlu0 %303
    %v305 = vld [vmem:[#allocation3] sm:$0x1]
    %v307 = vlaneseq
    %v308 = vshrl.u32 %v307, 7
    %v309 = vsub.s32 0, %v308
    %v310 = vrot.slane %v305, %v309
    %v312 = vadd.f32 %v301, %v310
    %v313 = vadd.f32 %v304, %v310
    %v314 = vxor.u32 %v312, 2147483648
    %v315 = vxor.u32 %v313, 2147483648
    %v316 = vmul.f32 %v314, 1.442695
    %v317 = vpow.pop %v316
    %v318 = vmul.f32 %v315, 1.442695
    %v319 = vpow.pop %v318
    %v320 = vadd.f32 %v317, 1.0
    %v321 = vadd.f32 %v319, 1.0
    %v322 = vrcp.pop %v320
    %v323 = vmul.f32 1.0, %v322
    %v324 = vrcp.pop %v321
    %v325 = vmul.f32 1.0, %v324
    %vm326 = vcmask 7168
    %327 = vst.msk [vmem:[%s10] sm:$0xff] %vm326, %v323
    %328 = vst.msk [vmem:[%s10 + $0x8] sm:$0xff] %vm326, %v325
  $region45: #{flat_bert_multitask_forward.14} parent=0 // pred_fallthru
    _
  // Predicated region
  $region46: #{flat_bert_multitask_forward.14} parent=0 // pred_check
    _
  $region47: #{flat_bert_multitask_forward.14} parent=0 // pred_check_branch
    %330 = sbr.rel (0) target = $region49
  $region48: #{flat_bert_multitask_forward.14} parent=0 // pred_region
    _
  $region49: #{flat_bert_multitask_forward.14} parent=0 // pred_fallthru
    _
  // Predicated region
  $region50: #{flat_bert_multitask_forward.14} parent=0 // pred_check
    _
  $region51: #{flat_bert_multitask_forward.14} parent=0 // pred_check_branch
    %332 = sbr.rel (0) target = $region53
  $region52: #{flat_bert_multitask_forward.14} parent=0 // pred_region
    _
  $region53: #{flat_bert_multitask_forward.14} parent=0 // pred_fallthru
    _
  // Predicated region
  $region54: #{flat_bert_multitask_forward.14} parent=0 // pred_check
    _
  $region55: #{flat_bert_multitask_forward.14} parent=0 // pred_check_branch
    %334 = sbr.rel (0) target = $region57
  $region56: #{flat_bert_multitask_forward.14} parent=0 // pred_region
    _
  $region57: #{flat_bert_multitask_forward.14} parent=0 // pred_fallthru
    _
  // Predicated region
  $region58: #{flat_bert_multitask_forward.14} parent=0 // pred_check
    _
  $region59: #{flat_bert_multitask_forward.14} parent=0 // pred_check_branch
    %336 = sbr.rel (0) target = $region61
  $region60: #{flat_bert_multitask_forward.14} parent=0 // pred_region
    _
  $region61: #{flat_bert_multitask_forward.14} parent=0 // pred_fallthru
    _

</llo_original>
